<compile_context>
chip_gen: v7x
topology: tpu7x:2x2x1
jax: 0.10.0
libtpu: 0.0.40
codegen_flags: <defaults>
</compile_context>

<pallas_src>
import jax
import jax.numpy as jnp
from jax.experimental import pallas as pl
from jax.experimental.pallas import tpu as pltpu


LANE = 128
SUB = 8
NEG_INF = -1e9


def _round_up(x, m):
    return (x + m - 1) // m * m


def _pow2_floor(x):
    p = 1
    while p * 2 <= x:
        p *= 2
    return p


def _make_kernel(TK, KC, tanh_dtype):
    """Build the kernel closed over static tile/chunk sizes and tanh dtype."""

    def kernel(q_ref, k_ref, hv_ref, mask_ref, wa_ref, wt_ref, bt_ref,
               o_ref, m_sc, l_sc, acc_sc, s_sc):
        ki = pl.program_id(2)

        # --- init online-softmax state for this (batch, query-tile) ----------
        @pl.when(ki == 0)
        def _():
            m_sc[...] = jnp.full_like(m_sc, -jnp.inf)
            l_sc[...] = jnp.zeros_like(l_sc)
            acc_sc[...] = jnp.zeros_like(acc_sc)

        q = q_ref[0]           # (TQ, H)  pre-projected queries (resident across ki)
        k = k_ref[0]           # (TK, H)  pre-projected keys for this key tile
        hv = hv_ref[0]         # (TK, H)  raw hidden (values) for this key tile
        wa = wa_ref[0]         # (H,)     lane-dense attention-weight row

        # --- additive scores, computed in key sub-chunks so the (TQ, KC, H)
        #     tanh panel stays small and the full (TQ, TK, H) panel is never
        #     materialized in VMEM.  The (TQ, TK) score block is assembled in
        #     the s_sc scratch buffer.
        for c0 in range(0, TK, KC):                        # static, unrolled at trace
            kc = k[c0:c0 + KC, :]                          # (KC, H)
            pair = q[:, None, :] + kc[None, :, :]          # (TQ, KC, H) f32
            t = jnp.tanh(pair.astype(tanh_dtype))          # bf16 tanh on v6e/v7x
            s_sc[:, c0:c0 + KC] = jnp.sum(t.astype(jnp.float32) * wa, axis=-1)

        s = s_sc[...] + mask_ref[0]                        # (TQ, TK); b_a in mask

        # --- online softmax update -------------------------------------------
        m_prev = m_sc[...]                                 # (TQ, 1)
        m_new = jnp.maximum(m_prev, jnp.max(s, axis=-1, keepdims=True))
        alpha = jnp.exp(m_prev - m_new)
        p = jnp.exp(s - m_new)                             # (TQ, TK)
        l_sc[...] = alpha * l_sc[...] + jnp.sum(p, axis=-1, keepdims=True)
        acc_sc[...] = alpha * acc_sc[...] + jnp.dot(
            p.astype(jnp.bfloat16), hv.astype(jnp.bfloat16),
            preferred_element_type=jnp.float32)
        m_sc[...] = m_new

        # --- finalize: normalize, output transform, residual on Q -------------
        @pl.when(ki == pl.num_programs(2) - 1)
        def _():
            wv = acc_sc[...] * pl.reciprocal(l_sc[...], approx=True)   # (TQ, H)
            out = (jnp.dot(wv, wt_ref[...], preferred_element_type=jnp.float32)
                   + bt_ref[...] + q)
            o_ref[0] = out.astype(o_ref.dtype)

    return kernel


def additive_attention(hidden_states, attention_mask, params):
    """hidden_states: (B, S, H) f32; attention_mask: (B, S, S) f32 (additive)."""
    B, S, H = hidden_states.shape
    wq, bq, wk, bk, wa, ba, wt, bt = params

    H_pad = _round_up(H, LANE)

    # Query axis: sublane/TQ alignment only.  Key axis: lane (128) alignment.
    TQ = min(128, _round_up(S, SUB))
    Sq_pad = _round_up(S, TQ)
    Sk_pad = _round_up(S, LANE)
    TK = 256 if (Sk_pad % 256 == 0) else 128

    # Key sub-chunk: keep the per-chunk (TQ, KC, H) f32 tanh panel <= ~512 KiB.
    panel_budget = 512 * 1024
    kc = max(1, panel_budget // (TQ * H_pad * 4))
    KC = min(TK, max(SUB, _pow2_floor(kc)))          # power of 2 -> divides TK

    # bf16 tanh only where the EUP supports it (v6e / v7x); f32 on v5e/others.
    kind = jax.devices()[0].device_kind.lower()
    tanh_dtype = jnp.bfloat16 if ("v6" in kind or "v7" in kind) else jnp.float32

    # Per-generation VMEM budget (v5e/v6e 128 MiB physical, v7x 64 MiB).
    vmem_cap = 64 * 1024 * 1024
    try:
        vmem_cap = int(getattr(pltpu.get_tpu_info(), "vmem_capacity_bytes",
                               vmem_cap))
    except Exception:
        pass
    vmem_limit = max(32 * 1024 * 1024, (vmem_cap // 4) * 3)

    # ---- hoisted Q/K projections (once, outside the kernel's key loop) ------
    # PyTorch Linear stores weight as (out, in) and computes x @ W.T + b.
    q = hidden_states @ wq.T + bq                     # (B, S, H)
    k = hidden_states @ wk.T + bk                     # (B, S, H)

    # ---- pad activations / mask / weights to aligned shapes -----------------
    q_p = jnp.pad(q, ((0, 0), (0, Sq_pad - S), (0, H_pad - H)))
    k_p = jnp.pad(k, ((0, 0), (0, Sk_pad - S), (0, H_pad - H)))
    h_p = jnp.pad(hidden_states, ((0, 0), (0, Sk_pad - S), (0, H_pad - H)))

    # b_a folded into the additive mask (softmax shift-invariance => exact).
    # Padded keys get NEG_INF so they carry ~zero probability.
    mask_b = attention_mask + ba[0]
    mask_p = jnp.pad(mask_b, ((0, 0), (0, Sq_pad - S), (0, 0)))
    mask_p = jnp.pad(mask_p, ((0, 0), (0, 0), (0, Sk_pad - S)),
                     constant_values=NEG_INF)

    def pad2(w, r, c):
        return jnp.pad(w, ((0, r - w.shape[0]), (0, c - w.shape[1])))

    wa_row = pad2(wa.reshape(1, H), 1, H_pad)         # lane-dense w_a row
    wt_t = pad2(wt.T, H_pad, H_pad)                   # pre-transposed transform
    bt2 = pad2(bt.reshape(1, H), 1, H_pad)

    const = lambda shape: pl.BlockSpec(shape, lambda b, qi, ki: (0, 0))

    kernel = _make_kernel(TK, KC, tanh_dtype)

    out_p = pl.pallas_call(
        kernel,
        out_shape=jax.ShapeDtypeStruct((B, Sq_pad, H_pad), hidden_states.dtype),
        grid=(B, Sq_pad // TQ, Sk_pad // TK),
        in_specs=[
            pl.BlockSpec((1, TQ, H_pad), lambda b, qi, ki: (b, qi, 0)),  # Q tile
            pl.BlockSpec((1, TK, H_pad), lambda b, qi, ki: (b, ki, 0)),  # K tile
            pl.BlockSpec((1, TK, H_pad), lambda b, qi, ki: (b, ki, 0)),  # value tile
            pl.BlockSpec((1, TQ, TK),    lambda b, qi, ki: (b, qi, ki)), # mask block
            const((1, H_pad)),                                           # w_a
            const((H_pad, H_pad)),                                       # Wt
            const((1, H_pad)),                                           # bt
        ],
        out_specs=pl.BlockSpec((1, TQ, H_pad), lambda b, qi, ki: (b, qi, 0)),
        scratch_shapes=[
            pltpu.VMEM((TQ, 1), jnp.float32),       # running max
            pltpu.VMEM((TQ, 1), jnp.float32),       # running denom
            pltpu.VMEM((TQ, H_pad), jnp.float32),   # running weighted value
            pltpu.VMEM((TQ, TK), jnp.float32),      # assembled score block
        ],
        compiler_params=pltpu.CompilerParams(
            dimension_semantics=("parallel", "parallel", "arbitrary"),
            vmem_limit_bytes=vmem_limit),
    )(q_p, k_p, h_p, mask_p, wa_row, wt_t, bt2)

    return out_p[:, :S, :H]


def _reference(hidden_states, attention_mask, params):
    """Pure-JAX reference (intended per-batch semantics)."""
    wq, bq, wk, bk, wa, ba, wt, bt = params
    q = hidden_states @ wq.T + bq
    k = hidden_states @ wk.T + bk
    pair = jnp.tanh(q[:, :, None, :] + k[:, None, :, :])
    scores = jnp.einsum('bijh,oh->bij', pair, wa) + ba[0]
    scores = scores + attention_mask
    probs = jax.nn.softmax(scores, axis=-1)
    wv = jnp.einsum('bij,bjh->bih', probs, hidden_states)
    return wv @ wt.T + bt + q


if __name__ == "__main__":
    B, S, H = 2, 8, 32
    initializer_range = 0.02

    key = jax.random.PRNGKey(0)
    keys = jax.random.split(key, 6)

    hidden_states = jax.random.normal(keys[0], (B, S, H), dtype=jnp.float32)
    attention_mask = 0.1 * jax.random.normal(keys[1], (B, S, S), dtype=jnp.float32)

    # Parameter init mirrors init_weights: weights ~ N(0, initializer_range),
    # biases = 0.
    wq = initializer_range * jax.random.normal(keys[2], (H, H), dtype=jnp.float32)
    wk = initializer_range * jax.random.normal(keys[3], (H, H), dtype=jnp.float32)
    wa = initializer_range * jax.random.normal(keys[4], (1, H), dtype=jnp.float32)
    wt = initializer_range * jax.random.normal(keys[5], (H, H), dtype=jnp.float32)
    bq = jnp.zeros((H,), dtype=jnp.float32)
    bk = jnp.zeros((H,), dtype=jnp.float32)
    ba = jnp.zeros((1,), dtype=jnp.float32)
    bt = jnp.zeros((H,), dtype=jnp.float32)
    params = (wq, bq, wk, bk, wa, ba, wt, bt)

    out = additive_attention(hidden_states, attention_mask, params)
    out = jax.block_until_ready(out)

    ref = _reference(hidden_states, attention_mask, params)
    assert out.shape == (B, S, H)
    assert jnp.allclose(out, ref, atol=2e-3, rtol=2e-3), \
        "mismatch vs pure-JAX reference"

    print("KERNEL_OK")
</pallas_src>

<mosaic_0001>
module attributes {stable_mosaic.version = 11 : i64} {
  func.func @kernel(%arg0: i32, %arg1: i32, %arg2: i32, %arg3: memref<1x8x128xf32, #tpu.memory_space<vmem>>, %arg4: memref<1x128x128xf32, #tpu.memory_space<vmem>>, %arg5: memref<1x128x128xf32, #tpu.memory_space<vmem>>, %arg6: memref<1x8x128xf32, #tpu.memory_space<vmem>>, %arg7: memref<1x128xf32, #tpu.memory_space<vmem>>, %arg8: memref<128x128xf32, #tpu.memory_space<vmem>>, %arg9: memref<1x128xf32, #tpu.memory_space<vmem>>, %arg10: memref<1x8x128xf32, #tpu.memory_space<vmem>>, %arg11: memref<8x1xf32, #tpu.memory_space<vmem>>, %arg12: memref<8x1xf32, #tpu.memory_space<vmem>>, %arg13: memref<8x128xf32, #tpu.memory_space<vmem>>, %arg14: memref<8x128xf32, #tpu.memory_space<vmem>>) attributes {dimension_semantics = [#tpu.dimension_semantics<parallel>, #tpu.dimension_semantics<parallel>, #tpu.dimension_semantics<arbitrary>], iteration_bounds = array<i64: 2, 1, 1>, scalar_prefetch = 0 : i64, scratch_operands = 4 : i64, tpu.core_type = #tpu.core_type<tc>, window_params = [{transform_indices = @transform_0, window_bounds = array<i64: 1, 8, 128>}, {transform_indices = @transform_1, window_bounds = array<i64: 1, 128, 128>}, {transform_indices = @transform_2, window_bounds = array<i64: 1, 128, 128>}, {transform_indices = @transform_3, window_bounds = array<i64: 1, 8, 128>}, {pipeline_mode = #tpu.pipeline_mode<synchronous>, transform_indices = @transform_4, window_bounds = array<i64: 1, 128>}, {pipeline_mode = #tpu.pipeline_mode<synchronous>, transform_indices = @transform_5, window_bounds = array<i64: 128, 128>}, {pipeline_mode = #tpu.pipeline_mode<synchronous>, transform_indices = @transform_6, window_bounds = array<i64: 1, 128>}, {transform_indices = @transform_7, window_bounds = array<i64: 1, 8, 128>}]} {
    %c0_i32 = arith.constant 0 : i32
    %0 = arith.cmpi eq, %arg2, %c0_i32 : i32
    %1 = arith.extui %0 : i1 to i32
    %c0_i32_0 = arith.constant 0 : i32
    %2 = arith.cmpi ne, %1, %c0_i32_0 : i32
    scf.if %2 {
      %cst_35 = arith.constant 0xFF800000 : f32
      %53 = vector.broadcast %cst_35 : f32 to vector<8x1xf32>
      %c0_36 = arith.constant 0 : index
      %c0_37 = arith.constant 0 : index
      %54 = vector.load %arg11[%c0_36, %c0_37] : memref<8x1xf32, #tpu.memory_space<vmem>>, vector<8x1xf32>
      tpu.vector_store %arg11[%c0_36, %c0_37], %53 {strides = array<i32>} : memref<8x1xf32, #tpu.memory_space<vmem>>, vector<8x1xf32>,
      %cst_38 = arith.constant 0.000000e+00 : f32
      %55 = vector.broadcast %cst_38 : f32 to vector<8x1xf32>
      %c0_39 = arith.constant 0 : index
      %c0_40 = arith.constant 0 : index
      %56 = vector.load %arg12[%c0_39, %c0_40] : memref<8x1xf32, #tpu.memory_space<vmem>>, vector<8x1xf32>
      tpu.vector_store %arg12[%c0_39, %c0_40], %55 {strides = array<i32>} : memref<8x1xf32, #tpu.memory_space<vmem>>, vector<8x1xf32>,
      %cst_41 = arith.constant 0.000000e+00 : f32
      %57 = vector.broadcast %cst_41 : f32 to vector<8x128xf32>
      %c0_42 = arith.constant 0 : index
      %c0_43 = arith.constant 0 : index
      %58 = vector.load %arg13[%c0_42, %c0_43] : memref<8x128xf32, #tpu.memory_space<vmem>>, vector<8x128xf32>
      tpu.vector_store %arg13[%c0_42, %c0_43], %57 {strides = array<i32>} : memref<8x128xf32, #tpu.memory_space<vmem>>, vector<8x128xf32>,
    } else {
    }
    %c0 = arith.constant 0 : index
    %c0_1 = arith.constant 0 : index
    %c0_2 = arith.constant 0 : index
    %3 = vector.load %arg3[%c0, %c0_1, %c0_2] : memref<1x8x128xf32, #tpu.memory_space<vmem>>, vector<1x8x128xf32>
    %4 = vector.shape_cast %3 : vector<1x8x128xf32> to vector<8x128xf32>
    %c0_3 = arith.constant 0 : index
    %c0_4 = arith.constant 0 : index
    %c0_5 = arith.constant 0 : index
    %5 = vector.load %arg4[%c0_3, %c0_4, %c0_5] : memref<1x128x128xf32, #tpu.memory_space<vmem>>, vector<1x128x128xf32>
    %6 = vector.shape_cast %5 : vector<1x128x128xf32> to vector<128x128xf32>
    %c0_6 = arith.constant 0 : index
    %c0_7 = arith.constant 0 : index
    %c0_8 = arith.constant 0 : index
    %7 = vector.load %arg5[%c0_6, %c0_7, %c0_8] : memref<1x128x128xf32, #tpu.memory_space<vmem>>, vector<1x128x128xf32>
    %8 = vector.shape_cast %7 : vector<1x128x128xf32> to vector<128x128xf32>
    %c0_9 = arith.constant 0 : index
    %c0_10 = arith.constant 0 : index
    %9 = vector.load %arg7[%c0_9, %c0_10] : memref<1x128xf32, #tpu.memory_space<vmem>>, vector<1x128xf32>
    %10 = vector.shape_cast %9 : vector<1x128xf32> to vector<128xf32>
    %11 = vector.shape_cast %4 : vector<8x128xf32> to vector<8x1x128xf32>
    %12 = vector.shape_cast %6 : vector<128x128xf32> to vector<1x128x128xf32>
    %13 = vector.broadcast %11 : vector<8x1x128xf32> to vector<8x128x128xf32>
    %14 = vector.broadcast %12 : vector<1x128x128xf32> to vector<8x128x128xf32>
    %15 = arith.addf %13, %14 : vector<8x128x128xf32>
    %16 = math.tanh %15 : vector<8x128x128xf32>
    %17 = vector.shape_cast %10 : vector<128xf32> to vector<1x1x128xf32>
    %18 = vector.broadcast %17 : vector<1x1x128xf32> to vector<8x128x128xf32>
    %19 = arith.mulf %16, %18 : vector<8x128x128xf32>
    %cst = arith.constant dense<0.000000e+00> : vector<8x128xf32>
    %20 = vector.multi_reduction <add>, %19, %cst [2] : vector<8x128x128xf32> to vector<8x128xf32>
    %c0_11 = arith.constant 0 : index
    %c0_12 = arith.constant 0 : index
    %21 = vector.load %arg14[%c0_11, %c0_12] : memref<8x128xf32, #tpu.memory_space<vmem>>, vector<8x128xf32>
    tpu.vector_store %arg14[%c0_11, %c0_12], %20 {strides = array<i32>} : memref<8x128xf32, #tpu.memory_space<vmem>>, vector<8x128xf32>,
    %c0_13 = arith.constant 0 : index
    %c0_14 = arith.constant 0 : index
    %22 = vector.load %arg14[%c0_13, %c0_14] : memref<8x128xf32, #tpu.memory_space<vmem>>, vector<8x128xf32>
    %c0_15 = arith.constant 0 : index
    %c0_16 = arith.constant 0 : index
    %c0_17 = arith.constant 0 : index
    %23 = vector.load %arg6[%c0_15, %c0_16, %c0_17] : memref<1x8x128xf32, #tpu.memory_space<vmem>>, vector<1x8x128xf32>
    %24 = vector.shape_cast %23 : vector<1x8x128xf32> to vector<8x128xf32>
    %25 = arith.addf %22, %24 : vector<8x128xf32>
    %c0_18 = arith.constant 0 : index
    %c0_19 = arith.constant 0 : index
    %26 = vector.load %arg11[%c0_18, %c0_19] : memref<8x1xf32, #tpu.memory_space<vmem>>, vector<8x1xf32>
    %cst_20 = arith.constant dense<0xFF800000> : vector<8xf32>
    %27 = vector.multi_reduction <maximumf>, %25, %cst_20 [1] : vector<8x128xf32> to vector<8xf32>
    %28 = vector.shape_cast %27 : vector<8xf32> to vector<8x1xf32>
    %29 = arith.maximumf %26, %28 : vector<8x1xf32>
    %30 = arith.subf %26, %29 : vector<8x1xf32>
    %31 = math.exp %30 : vector<8x1xf32>
    %32 = vector.broadcast %29 : vector<8x1xf32> to vector<8x128xf32>
    %33 = arith.subf %25, %32 : vector<8x128xf32>
    %34 = math.exp %33 : vector<8x128xf32>
    %c0_21 = arith.constant 0 : index
    %c0_22 = arith.constant 0 : index
    %35 = vector.load %arg12[%c0_21, %c0_22] : memref<8x1xf32, #tpu.memory_space<vmem>>, vector<8x1xf32>
    %36 = arith.mulf %31, %35 : vector<8x1xf32>
    %cst_23 = arith.constant dense<0.000000e+00> : vector<8xf32>
    %37 = vector.multi_reduction <add>, %34, %cst_23 [1] : vector<8x128xf32> to vector<8xf32>
    %38 = vector.shape_cast %37 : vector<8xf32> to vector<8x1xf32>
    %39 = arith.addf %36, %38 : vector<8x1xf32>
    %c0_24 = arith.constant 0 : index
    %c0_25 = arith.constant 0 : index
    %40 = vector.load %arg12[%c0_24, %c0_25] : memref<8x1xf32, #tpu.memory_space<vmem>>, vector<8x1xf32>
    tpu.vector_store %arg12[%c0_24, %c0_25], %39 {strides = array<i32>} : memref<8x1xf32, #tpu.memory_space<vmem>>, vector<8x1xf32>,
    %c0_26 = arith.constant 0 : index
    %c0_27 = arith.constant 0 : index
    %41 = vector.load %arg13[%c0_26, %c0_27] : memref<8x128xf32, #tpu.memory_space<vmem>>, vector<8x128xf32>
    %42 = vector.broadcast %31 : vector<8x1xf32> to vector<8x128xf32>
    %43 = arith.mulf %42, %41 : vector<8x128xf32>
    %44 = arith.truncf %34 : vector<8x128xf32> to vector<8x128xbf16>
    %45 = arith.truncf %8 : vector<128x128xf32> to vector<128x128xbf16>
    %cst_28 = arith.constant dense<0.000000e+00> : vector<8x128xf32>
    %46 = tpu.matmul %44, %45, %cst_28 {dimension_numbers = #tpu.dot_dimension_numbers<[1], [0], [0], [1], [0, 0, 1, 1], [], []>} : vector<8x128xbf16>, vector<128x128xbf16>, vector<8x128xf32> -> vector<8x128xf32>
    %47 = arith.addf %43, %46 : vector<8x128xf32>
    %c0_29 = arith.constant 0 : index
    %c0_30 = arith.constant 0 : index
    %48 = vector.load %arg13[%c0_29, %c0_30] : memref<8x128xf32, #tpu.memory_space<vmem>>, vector<8x128xf32>
    tpu.vector_store %arg13[%c0_29, %c0_30], %47 {strides = array<i32>} : memref<8x128xf32, #tpu.memory_space<vmem>>, vector<8x128xf32>,
    %c0_31 = arith.constant 0 : index
    %c0_32 = arith.constant 0 : index
    %49 = vector.load %arg11[%c0_31, %c0_32] : memref<8x1xf32, #tpu.memory_space<vmem>>, vector<8x1xf32>
    tpu.vector_store %arg11[%c0_31, %c0_32], %29 {strides = array<i32>} : memref<8x1xf32, #tpu.memory_space<vmem>>, vector<8x1xf32>,
    %c0_i32_33 = arith.constant 0 : i32
    %50 = arith.cmpi eq, %arg2, %c0_i32_33 : i32
    %51 = arith.extui %50 : i1 to i32
    %c0_i32_34 = arith.constant 0 : i32
    %52 = arith.cmpi ne, %51, %c0_i32_34 : i32
    scf.if %52 {
      %c0_35 = arith.constant 0 : index
      %c0_36 = arith.constant 0 : index
      %53 = vector.load %arg13[%c0_35, %c0_36] : memref<8x128xf32, #tpu.memory_space<vmem>>, vector<8x128xf32>
      %c0_37 = arith.constant 0 : index
      %c0_38 = arith.constant 0 : index
      %54 = vector.load %arg12[%c0_37, %c0_38] : memref<8x1xf32, #tpu.memory_space<vmem>>, vector<8x1xf32>
      %55 = tpu.reciprocal %54 {approx = true} : vector<8x1xf32> -> vector<8x1xf32>
      %56 = vector.broadcast %55 : vector<8x1xf32> to vector<8x128xf32>
      %57 = arith.mulf %53, %56 : vector<8x128xf32>
      %c0_39 = arith.constant 0 : index
      %c0_40 = arith.constant 0 : index
      %58 = vector.load %arg8[%c0_39, %c0_40] : memref<128x128xf32, #tpu.memory_space<vmem>>, vector<128x128xf32>
      %cst_41 = arith.constant dense<0.000000e+00> : vector<8x128xf32>
      %59 = tpu.matmul %57, %58, %cst_41 {dimension_numbers = #tpu.dot_dimension_numbers<[1], [0], [0], [1], [0, 0, 1, 1], [], []>} : vector<8x128xf32>, vector<128x128xf32>, vector<8x128xf32> -> vector<8x128xf32>
      %c0_42 = arith.constant 0 : index
      %c0_43 = arith.constant 0 : index
      %60 = vector.load %arg9[%c0_42, %c0_43] : memref<1x128xf32, #tpu.memory_space<vmem>>, vector<1x128xf32>
      %61 = vector.broadcast %60 : vector<1x128xf32> to vector<8x128xf32>
      %62 = arith.addf %59, %61 : vector<8x128xf32>
      %63 = arith.addf %62, %4 : vector<8x128xf32>
      %c0_44 = arith.constant 0 : index
      %c0_45 = arith.constant 0 : index
      %c0_46 = arith.constant 0 : index
      %64 = vector.load %arg10[%c0_44, %c0_45, %c0_46] : memref<1x8x128xf32, #tpu.memory_space<vmem>>, vector<1x8x128xf32>
      %65 = vector.shape_cast %64 : vector<1x8x128xf32> to vector<8x128xf32>
      %66 = vector.shape_cast %63 : vector<8x128xf32> to vector<1x8x128xf32>
      tpu.vector_store %arg10[%c0_44, %c0_45, %c0_46], %66 {strides = array<i32>} : memref<1x8x128xf32, #tpu.memory_space<vmem>>, vector<1x8x128xf32>,
    } else {
    }
    return
  }
  func.func @transform_0(%arg0: i32, %arg1: i32, %arg2: i32) -> (i32, i32, i32) {
    %c0_i32 = arith.constant 0 : i32
    %c0_i32_0 = arith.constant 0 : i32
    return %arg0, %arg1, %c0_i32 : i32, i32, i32
  }
  func.func @transform_1(%arg0: i32, %arg1: i32, %arg2: i32) -> (i32, i32, i32) {
    %c0_i32 = arith.constant 0 : i32
    %c0_i32_0 = arith.constant 0 : i32
    return %arg0, %arg2, %c0_i32 : i32, i32, i32
  }
  func.func @transform_2(%arg0: i32, %arg1: i32, %arg2: i32) -> (i32, i32, i32) {
    %c0_i32 = arith.constant 0 : i32
    %c0_i32_0 = arith.constant 0 : i32
    return %arg0, %arg2, %c0_i32 : i32, i32, i32
  }
  func.func @transform_3(%arg0: i32, %arg1: i32, %arg2: i32) -> (i32, i32, i32) {
    %c0_i32 = arith.constant 0 : i32
    return %arg0, %arg1, %arg2 : i32, i32, i32
  }
  func.func @transform_4(%arg0: i32, %arg1: i32, %arg2: i32) -> (i32, i32) {
    %c0_i32 = arith.constant 0 : i32
    %c0_i32_0 = arith.constant 0 : i32
    %c0_i32_1 = arith.constant 0 : i32
    return %c0_i32, %c0_i32_0 : i32, i32
  }
  func.func @transform_5(%arg0: i32, %arg1: i32, %arg2: i32) -> (i32, i32) {
    %c0_i32 = arith.constant 0 : i32
    %c0_i32_0 = arith.constant 0 : i32
    %c0_i32_1 = arith.constant 0 : i32
    return %c0_i32, %c0_i32_0 : i32, i32
  }
  func.func @transform_6(%arg0: i32, %arg1: i32, %arg2: i32) -> (i32, i32) {
    %c0_i32 = arith.constant 0 : i32
    %c0_i32_0 = arith.constant 0 : i32
    %c0_i32_1 = arith.constant 0 : i32
    return %c0_i32, %c0_i32_0 : i32, i32
  }
  func.func @transform_7(%arg0: i32, %arg1: i32, %arg2: i32) -> (i32, i32, i32) {
    %c0_i32 = arith.constant 0 : i32
    %c0_i32_0 = arith.constant 0 : i32
    return %arg0, %arg1, %c0_i32 : i32, i32, i32
  }
}

</mosaic_0001>

<llo_original>
// kernel: tpu_custom_call.1
$region0: #{tpu_custom_call.1}
  #allocation0 [shape = 'u32[]', space=smem, size = 0x4, offset = 0x4, fixed_abs, tag = 'smem constant byte address 0x4 - core index']
  #allocation1 [shape = 'u32[144,128]{1,0:T(1,128)}', space=vmem, size = 0x12000, scoped, tag = 'internal scratch']
  #allocation2 [shape = 'f32[8,1]{1,0:T(8,128)}', space=vmem, size = 0x1000, scoped, tag = 'scratch operand']
  #allocation3 [shape = 'f32[8,1]{1,0:T(8,128)}', space=vmem, size = 0x1000, scoped, tag = 'scratch operand']
  #allocation4 [shape = 'f32[8,128]{1,0:T(8,128)}', space=vmem, size = 0x1000, scoped, tag = 'scratch operand']
  #allocation5 [shape = 'f32[8,128]{1,0:T(8,128)}', space=vmem, size = 0x1000, scoped, tag = 'scratch operand']
  %s0 = inlined_call_operand.hbm [shape: f32[2,8,128], index: 0, kind: input, shape index: {}]
  %s1 = inlined_call_operand.hbm [shape: f32[2,128,128], index: 1, kind: input, shape index: {}]
  %s2 = inlined_call_operand.hbm [shape: f32[2,128,128], index: 2, kind: input, shape index: {}]
  %s3 = inlined_call_operand.hbm [shape: f32[2,8,128], index: 3, kind: input, shape index: {}]
  %s4 = inlined_call_operand.vmem [shape: f32[1,128], index: 4, kind: input, shape index: {}]
  %s5 = inlined_call_operand.hbm [shape: f32[128,128], index: 5, kind: input, shape index: {}]
  %s6 = inlined_call_operand.vmem [shape: f32[1,128], index: 6, kind: input, shape index: {}]
  %s7 = inlined_call_operand.hbm [shape: f32[2,8,128], index: 7, kind: output, shape index: {}]
  %s8 = sld [smem:[#allocation0]]
  $region89: #{tpu_custom_call.1} parent=0
    _
  %s10 = ssub.s32 1, %s8
  %s11 = scalar_select 0, %s10, %s8
  $region1: #{tpu_custom_call.1} parent=0
    #allocation6 [shape = 'u8[8192]{0}', space=vmem, size = 0x2000, scoped, tag = 'input window, operand 0']
    #allocation7 [shape = 's32[2]{0}', space=sflag, size = 0x8, scoped, tag = 'scoped memory for tpu_custom_call.1']
    #allocation8 [shape = 's32[2]{0}', space=sflag, size = 0x8, scoped, tag = 'scoped memory for tpu_custom_call.1']
    #allocation9 [shape = 'u8[131072]{0}', space=vmem, size = 0x20000, scoped, tag = 'input window, operand 1']
    #allocation10 [shape = 's32[2]{0}', space=sflag, size = 0x8, scoped, tag = 'scoped memory for tpu_custom_call.1']
    #allocation11 [shape = 'u8[131072]{0}', space=vmem, size = 0x20000, scoped, tag = 'input window, operand 2']
    #allocation12 [shape = 'u8[8192]{0}', space=vmem, size = 0x2000, scoped, tag = 'input window, operand 3']
    #allocation13 [shape = 's32[2]{0}', space=sflag, size = 0x8, scoped, tag = 'scoped memory for tpu_custom_call.1']
    #allocation14 [shape = 'u8[65536]{0}', space=vmem, size = 0x10000, scoped, tag = 'input window, operand 5, single buffered']
    #allocation15 [shape = 'u8[8192]{0}', space=vmem, size = 0x2000, scoped, tag = 'output window, operand 0']
    %12 = vsyncpa [#allocation7], 0
    %s13 = scalar_lea.sflag [#allocation7], 1
    %14 = vsyncpa %s13, 0
    %15 = vsyncpa [#allocation10], 0
    %s16 = scalar_lea.sflag [#allocation10], 1
    %17 = vsyncpa %s16, 0
    %18 = vsyncpa [#allocation13], 0
    %s19 = scalar_lea.sflag [#allocation13], 1
    %20 = vsyncpa %s19, 0
    %21 = vsyncpa [#allocation8], 0
    %s22 = scalar_lea.sflag [#allocation8], 1
    %23 = vsyncpa %s22, 0
    loop: start=0, step=1, limit=4
    $region2: #{tpu_custom_call.1} parent=1 // loop_pre_header
      _
    $region3: #{tpu_custom_call.1} parent=1 // loop_header
      %s25 = sphi 0, %s29
      %p26 = scmp.ge.s32.totalorder %s25, 4
      %s32 = sphi 0, %s51
      %s33 = sphi 0, %s47
      %s34 = sphi 0, %s43
      %s35 = sphi 0, %s32
      %s36 = sphi 0, %s33
      %s37 = sphi 0, %s34
      %s38 = sphi 0, %s35
      %s39 = sphi 0, %s36
      %s40 = sphi 0, %s37
      %s56 = sphi 0, %s58
      %s59 = sphi 0, %s56
      %s60 = sphi 0, %s59
      %s76 = sphi 0, %s60
      %s84 = sphi 0, %s86
      %s87 = sphi 0, %s84
      %s88 = sphi 0, %s87
      %s104 = sphi 0, %s88
      %s112 = sphi 0, %s114
      %s115 = sphi 0, %s112
      %s116 = sphi 0, %s115
      %s132 = sphi 0, %s116
      %s142 = sphi 0, %s144
      %s145 = sphi 0, %s142
      %s146 = sphi 0, %s145
      %s162 = sphi 0, %s146
      %s166 = sphi 0, %s166
      %s168 = sphi 0, %s166
      %s169 = sphi 0, %s168
      %s183 = sphi 0, %s169
      %s187 = sphi 0, %s187
      %s189 = sphi 0, %s187
      %s190 = sphi 0, %s189
      %s204 = sphi 0, %s190
      %s208 = sphi 0, %s208
      %s210 = sphi 0, %s208
      %s211 = sphi 0, %s210
      %s225 = sphi 0, %s211
      %s233 = sphi 0, %s235
      %s236 = sphi 0, %s233
      %s237 = sphi 0, %s236
      %s253 = sphi 0, %s237
    $region4: #{tpu_custom_call.1} parent=1 // loop_header_branch
      %28 = sbr.rel (%p26) target = $region8
    $region5: #{tpu_custom_call.1} parent=1 // loop_body
      %s30 = ssub.s32 %s25, 1
      %s31 = ssub.s32 %s25, 2
      %s41 = sadd.s32 1, %s34
      %p42 = scmp.ge.s32.totalorder %s41, 1
      %s43 = scalar_select %p42, 0, %s41
      %s44 = sadd.s32 1, %s33
      %s45 = scalar_select %p42, %s44, %s33
      %p46 = scmp.ge.s32.totalorder %s45, 1
      %s47 = scalar_select %p46, 0, %s45
      %s48 = sadd.s32 1, %s32
      %s49 = scalar_select %p46, %s48, %s32
      %p50 = scmp.ge.s32.totalorder %s49, 2
      %s51 = scalar_select %p50, 0, %s49
      %s52 = ssub.s32 %s32, %s51
      %s53 = ssub.s32 %s33, %s47
      %s54 = sor.u32 %s52, %s53
      %p55 = scmp.eq.s32.totalorder %s54, 0
      %s57 = sadd.s32 %s56, 1
      %s58 = scalar_select %p55, %s56, %s57
      %p61 = pneg %p55
      %p62 = scmp.eq.s32.totalorder %s25, 1
      %p63 = por %p61, %p62
      %p64 = scmp.ne.s32.totalorder %s56, %s59
      %p65 = scmp.eq.s32.totalorder %s25, 0
      %p66 = por %p64, %p65
      %p67 = scmp.ne.s32.totalorder %s56, %s59
      %p68 = scmp.eq.s32.totalorder %s30, 1
      %p69 = por %p67, %p68
      %p70 = scmp.ne.s32.totalorder %s59, %s60
      %p71 = scmp.eq.s32.totalorder %s30, 0
      %p72 = por %p70, %p71
      %p73 = scmp.ne.s32.totalorder %s59, %s60
      %p74 = scmp.eq.s32.totalorder %s31, 1
      %p75 = por %p73, %p74
      %p77 = scmp.ne.s32.totalorder %s60, %s76
      %p78 = scmp.eq.s32.totalorder %s31, 0
      %p79 = por %p77, %p78
      %s80 = ssub.s32 %s32, %s51
      %s81 = ssub.s32 %s34, %s43
      %s82 = sor.u32 %s80, %s81
      %p83 = scmp.eq.s32.totalorder %s82, 0
      %s85 = sadd.s32 %s84, 1
      %s86 = scalar_select %p83, %s84, %s85
      %p89 = pneg %p83
      %p90 = scmp.eq.s32.totalorder %s25, 1
      %p91 = por %p89, %p90
      %p92 = scmp.ne.s32.totalorder %s84, %s87
      %p93 = scmp.eq.s32.totalorder %s25, 0
      %p94 = por %p92, %p93
      %p95 = scmp.ne.s32.totalorder %s84, %s87
      %p96 = scmp.eq.s32.totalorder %s30, 1
      %p97 = por %p95, %p96
      %p98 = scmp.ne.s32.totalorder %s87, %s88
      %p99 = scmp.eq.s32.totalorder %s30, 0
      %p100 = por %p98, %p99
      %p101 = scmp.ne.s32.totalorder %s87, %s88
      %p102 = scmp.eq.s32.totalorder %s31, 1
      %p103 = por %p101, %p102
      %p105 = scmp.ne.s32.totalorder %s88, %s104
      %p106 = scmp.eq.s32.totalorder %s31, 0
      %p107 = por %p105, %p106
      %s108 = ssub.s32 %s32, %s51
      %s109 = ssub.s32 %s34, %s43
      %s110 = sor.u32 %s108, %s109
      %p111 = scmp.eq.s32.totalorder %s110, 0
      %s113 = sadd.s32 %s112, 1
      %s114 = scalar_select %p111, %s112, %s113
      %p117 = pneg %p111
      %p118 = scmp.eq.s32.totalorder %s25, 1
      %p119 = por %p117, %p118
      %p120 = scmp.ne.s32.totalorder %s112, %s115
      %p121 = scmp.eq.s32.totalorder %s25, 0
      %p122 = por %p120, %p121
      %p123 = scmp.ne.s32.totalorder %s112, %s115
      %p124 = scmp.eq.s32.totalorder %s30, 1
      %p125 = por %p123, %p124
      %p126 = scmp.ne.s32.totalorder %s115, %s116
      %p127 = scmp.eq.s32.totalorder %s30, 0
      %p128 = por %p126, %p127
      %p129 = scmp.ne.s32.totalorder %s115, %s116
      %p130 = scmp.eq.s32.totalorder %s31, 1
      %p131 = por %p129, %p130
      %p133 = scmp.ne.s32.totalorder %s116, %s132
      %p134 = scmp.eq.s32.totalorder %s31, 0
      %p135 = por %p133, %p134
      %s136 = ssub.s32 %s32, %s51
      %s137 = ssub.s32 %s33, %s47
      %s138 = sor.u32 %s136, %s137
      %s139 = ssub.s32 %s34, %s43
      %s140 = sor.u32 %s138, %s139
      %p141 = scmp.eq.s32.totalorder %s140, 0
      %s143 = sadd.s32 %s142, 1
      %s144 = scalar_select %p141, %s142, %s143
      %p147 = pneg %p141
      %p148 = scmp.eq.s32.totalorder %s25, 1
      %p149 = por %p147, %p148
      %p150 = scmp.ne.s32.totalorder %s142, %s145
      %p151 = scmp.eq.s32.totalorder %s25, 0
      %p152 = por %p150, %p151
      %p153 = scmp.ne.s32.totalorder %s142, %s145
      %p154 = scmp.eq.s32.totalorder %s30, 1
      %p155 = por %p153, %p154
      %p156 = scmp.ne.s32.totalorder %s145, %s146
      %p157 = scmp.eq.s32.totalorder %s30, 0
      %p158 = por %p156, %p157
      %p159 = scmp.ne.s32.totalorder %s145, %s146
      %p160 = scmp.eq.s32.totalorder %s31, 1
      %p161 = por %p159, %p160
      %p163 = scmp.ne.s32.totalorder %s146, %s162
      %p164 = scmp.eq.s32.totalorder %s31, 0
      %p165 = por %p163, %p164
      %s167 = sadd.s32 %s166, 1
      %p170 = scmp.eq.s32.totalorder %s25, 1
      %p171 = scmp.ne.s32.totalorder %s166, %s168
      %p172 = scmp.eq.s32.totalorder %s25, 0
      %p173 = por %p171, %p172
      %p174 = scmp.ne.s32.totalorder %s166, %s168
      %p175 = scmp.eq.s32.totalorder %s30, 1
      %p176 = por %p174, %p175
      %p177 = scmp.ne.s32.totalorder %s168, %s169
      %p178 = scmp.eq.s32.totalorder %s30, 0
      %p179 = por %p177, %p178
      %p180 = scmp.ne.s32.totalorder %s168, %s169
      %p181 = scmp.eq.s32.totalorder %s31, 1
      %p182 = por %p180, %p181
      %p184 = scmp.ne.s32.totalorder %s169, %s183
      %p185 = scmp.eq.s32.totalorder %s31, 0
      %p186 = por %p184, %p185
      %s188 = sadd.s32 %s187, 1
      %p191 = scmp.eq.s32.totalorder %s25, 1
      %p192 = scmp.ne.s32.totalorder %s187, %s189
      %p193 = scmp.eq.s32.totalorder %s25, 0
      %p194 = por %p192, %p193
      %p195 = scmp.ne.s32.totalorder %s187, %s189
      %p196 = scmp.eq.s32.totalorder %s30, 1
      %p197 = por %p195, %p196
      %p198 = scmp.ne.s32.totalorder %s189, %s190
      %p199 = scmp.eq.s32.totalorder %s30, 0
      %p200 = por %p198, %p199
      %p201 = scmp.ne.s32.totalorder %s189, %s190
      %p202 = scmp.eq.s32.totalorder %s31, 1
      %p203 = por %p201, %p202
      %p205 = scmp.ne.s32.totalorder %s190, %s204
      %p206 = scmp.eq.s32.totalorder %s31, 0
      %p207 = por %p205, %p206
      %s209 = sadd.s32 %s208, 1
      %p212 = scmp.eq.s32.totalorder %s25, 1
      %p213 = scmp.ne.s32.totalorder %s208, %s210
      %p214 = scmp.eq.s32.totalorder %s25, 0
      %p215 = por %p213, %p214
      %p216 = scmp.ne.s32.totalorder %s208, %s210
      %p217 = scmp.eq.s32.totalorder %s30, 1
      %p218 = por %p216, %p217
      %p219 = scmp.ne.s32.totalorder %s210, %s211
      %p220 = scmp.eq.s32.totalorder %s30, 0
      %p221 = por %p219, %p220
      %p222 = scmp.ne.s32.totalorder %s210, %s211
      %p223 = scmp.eq.s32.totalorder %s31, 1
      %p224 = por %p222, %p223
      %p226 = scmp.ne.s32.totalorder %s211, %s225
      %p227 = scmp.eq.s32.totalorder %s31, 0
      %p228 = por %p226, %p227
      %s229 = ssub.s32 %s32, %s51
      %s230 = ssub.s32 %s33, %s47
      %s231 = sor.u32 %s229, %s230
      %p232 = scmp.eq.s32.totalorder %s231, 0
      %s234 = sadd.s32 %s233, 1
      %s235 = scalar_select %p232, %s233, %s234
      %p238 = pneg %p232
      %p239 = scmp.eq.s32.totalorder %s25, 1
      %p240 = por %p238, %p239
      %p241 = scmp.ne.s32.totalorder %s233, %s236
      %p242 = scmp.eq.s32.totalorder %s25, 0
      %p243 = por %p241, %p242
      %p244 = scmp.ne.s32.totalorder %s233, %s236
      %p245 = scmp.eq.s32.totalorder %s30, 1
      %p246 = por %p244, %p245
      %p247 = scmp.ne.s32.totalorder %s236, %s237
      %p248 = scmp.eq.s32.totalorder %s30, 0
      %p249 = por %p247, %p248
      %p250 = scmp.ne.s32.totalorder %s236, %s237
      %p251 = scmp.eq.s32.totalorder %s31, 1
      %p252 = por %p250, %p251
      %p254 = scmp.ne.s32.totalorder %s237, %s253
      %p255 = scmp.eq.s32.totalorder %s31, 0
      %p256 = por %p254, %p255
      %p257 = scmp.le.s32.totalorder 1, %s25
      %p258 = scmp.lt.s32.totalorder %s25, 3
      %p259 = pnand %p257, %p258
      %p260 = pneg %p259
      // Predicated region
      $region9: #{tpu_custom_call.1} parent=5 // pred_check
        _
      $region10: #{tpu_custom_call.1} parent=5 // pred_check_branch
        %262 = sbr.rel (%p259) target = $region12
      $region11: #{tpu_custom_call.1} parent=5 // pred_region
        %s263 = ssub.s32 %s25, 1
        // Predicated region
        $region13: #{tpu_custom_call.1} parent=11 // pred_check
          %p264 = pneg %p179
        $region14: #{tpu_custom_call.1} parent=11 // pred_check_branch
          %266 = sbr.rel (%p264) target = $region16
        $region15: #{tpu_custom_call.1} parent=11 // pred_region
          _
        $region16: #{tpu_custom_call.1} parent=11 // pred_fallthru
          _
        // Predicated region
        $region17: #{tpu_custom_call.1} parent=11 // pred_check
          %p267 = pneg %p200
        $region18: #{tpu_custom_call.1} parent=11 // pred_check_branch
          %269 = sbr.rel (%p267) target = $region20
        $region19: #{tpu_custom_call.1} parent=11 // pred_region
          %s271 = ssub.s32 2048, 2048
          %272 = vsyncadd [#allocation13], %s271
          %s273 = sshll.u32 [#allocation14], 4
          %s274 = int_to_ptr.vmem [resolvable:$true] %s273
          %279 = dma.hbm_to_vmem [thread:$0]  %s5, 2048, %s274, [#allocation13], 128, 128, 8
        $region20: #{tpu_custom_call.1} parent=11 // pred_fallthru
          _
        // Predicated region
        $region21: #{tpu_custom_call.1} parent=11 // pred_check
          %p280 = pneg %p221
        $region22: #{tpu_custom_call.1} parent=11 // pred_check_branch
          %282 = sbr.rel (%p280) target = $region24
        $region23: #{tpu_custom_call.1} parent=11 // pred_region
          _
        $region24: #{tpu_custom_call.1} parent=11 // pred_fallthru
          _
      $region12: #{tpu_custom_call.1} parent=5 // pred_fallthru
        _
      %p283 = scmp.lt.s32.totalorder %s25, 2
      // Predicated region
      $region25: #{tpu_custom_call.1} parent=5 // pred_check
        %p284 = pneg %p283
      $region26: #{tpu_custom_call.1} parent=5 // pred_check_branch
        %286 = sbr.rel (%p284) target = $region28
      $region27: #{tpu_custom_call.1} parent=5 // pred_region
        // Predicated region
        $region29: #{tpu_custom_call.1} parent=27 // pred_check
          %p287 = pneg %p66
        $region30: #{tpu_custom_call.1} parent=27 // pred_check_branch
          %289 = sbr.rel (%p287) target = $region32
        $region31: #{tpu_custom_call.1} parent=27 // pred_region
          %s290 = sand.u32 %s56, 1
          %s291 = scalar_lea.sflag [#allocation7], %s290
          %s292 = sand.u32 %s56, 1
          %s293 = smul.addr %s292, 8
          %s294 = scalar_lea.vmem [#allocation6], %s293
          %s296 = ssub.s32 128, 128
          %297 = vsyncadd %s291, %s296
          %s298 = sadd.s32 %s33, %s32
          %s299 = smul.addr %s298, 128
          %s300 = scalar_lea.hbm %s0, %s299
          %s302 = sshll.u32 %s294, 4
          %s303 = int_to_ptr.vmem [resolvable:$true] %s302
          %305 = dma.hbm_to_vmem [thread:$0]  %s300, 128, %s303, %s291
        $region32: #{tpu_custom_call.1} parent=27 // pred_fallthru
          _
        // Predicated region
        $region33: #{tpu_custom_call.1} parent=27 // pred_check
          %p306 = pneg %p94
        $region34: #{tpu_custom_call.1} parent=27 // pred_check_branch
          %308 = sbr.rel (%p306) target = $region36
        $region35: #{tpu_custom_call.1} parent=27 // pred_region
          %s309 = sand.u32 %s25, 1
          %s310 = scalar_lea.sflag [#allocation10], %s309
          %s311 = sand.u32 %s84, 1
          %s312 = smul.addr %s311, 128
          %s313 = scalar_lea.vmem [#allocation9], %s312
          %s314 = smul.u32 16, %s34
          %s316 = ssub.s32 2048, 2048
          %317 = vsyncadd %s310, %s316
          %s318 = smul.addr %s32, 16
          %s319 = sadd.s32 %s314, %s318
          %s320 = smul.addr %s319, 128
          %s321 = scalar_lea.hbm %s1, %s320
          %s322 = sshll.u32 %s313, 4
          %s323 = int_to_ptr.vmem [resolvable:$true] %s322
          %328 = dma.hbm_to_vmem [thread:$0]  %s321, 2048, %s323, %s310, 128, 128, 8
        $region36: #{tpu_custom_call.1} parent=27 // pred_fallthru
          _
        // Predicated region
        $region37: #{tpu_custom_call.1} parent=27 // pred_check
          %p329 = pneg %p122
        $region38: #{tpu_custom_call.1} parent=27 // pred_check_branch
          %331 = sbr.rel (%p329) target = $region40
        $region39: #{tpu_custom_call.1} parent=27 // pred_region
          %s332 = sand.u32 %s25, 1
          %s333 = scalar_lea.sflag [#allocation10], %s332
          %s334 = sand.u32 %s112, 1
          %s335 = smul.addr %s334, 128
          %s336 = scalar_lea.vmem [#allocation11], %s335
          %s337 = smul.u32 16, %s34
          %s339 = ssub.s32 2048, 2048
          %340 = vsyncadd %s333, %s339
          %s341 = smul.addr %s32, 16
          %s342 = sadd.s32 %s337, %s341
          %s343 = smul.addr %s342, 128
          %s344 = scalar_lea.hbm %s2, %s343
          %s345 = sshll.u32 %s336, 4
          %s346 = int_to_ptr.vmem [resolvable:$true] %s345
          %351 = dma.hbm_to_vmem [thread:$0]  %s344, 2048, %s346, %s333, 128, 128, 8
        $region40: #{tpu_custom_call.1} parent=27 // pred_fallthru
          _
        // Predicated region
        $region41: #{tpu_custom_call.1} parent=27 // pred_check
          %p352 = pneg %p152
        $region42: #{tpu_custom_call.1} parent=27 // pred_check_branch
          %354 = sbr.rel (%p352) target = $region44
        $region43: #{tpu_custom_call.1} parent=27 // pred_region
          %s355 = sand.u32 %s25, 1
          %s356 = scalar_lea.sflag [#allocation13], %s355
          %s357 = sand.u32 %s142, 1
          %s358 = smul.addr %s357, 8
          %s359 = scalar_lea.vmem [#allocation12], %s358
          %s361 = ssub.s32 128, 128
          %362 = vsyncadd %s356, %s361
          %s363 = sadd.s32 %s34, %s33
          %s364 = sadd.s32 %s363, %s32
          %s365 = smul.addr %s364, 128
          %s366 = scalar_lea.hbm %s3, %s365
          %s368 = sshll.u32 %s359, 4
          %s369 = int_to_ptr.vmem [resolvable:$true] %s368
          %371 = dma.hbm_to_vmem [thread:$0]  %s366, 128, %s369, %s356
        $region44: #{tpu_custom_call.1} parent=27 // pred_fallthru
          _
      $region28: #{tpu_custom_call.1} parent=5 // pred_fallthru
        _
      %p372 = scmp.le.s32.totalorder 1, %s25
      %p373 = scmp.lt.s32.totalorder %s25, 3
      %p374 = pnand %p372, %p373
      %p375 = pneg %p374
      // Predicated region
      $region45: #{tpu_custom_call.1} parent=5 // pred_check
        _
      $region46: #{tpu_custom_call.1} parent=5 // pred_check_branch
        %377 = sbr.rel (%p374) target = $region48
      $region47: #{tpu_custom_call.1} parent=5 // pred_region
        %s378 = ssub.s32 %s25, 1
        %s379 = sand.u32 %s59, 1
        %s380 = scalar_lea.sflag [#allocation7], %s379
        %s381 = sand.u32 %s59, 1
        %s382 = smul.addr %s381, 8
        %s383 = scalar_lea.vmem [#allocation6], %s382
        // Predicated region
        $region49: #{tpu_custom_call.1} parent=47 // pred_check
          %p384 = pneg %p72
        $region50: #{tpu_custom_call.1} parent=47 // pred_check_branch
          %386 = sbr.rel (%p384) target = $region52
        $region51: #{tpu_custom_call.1} parent=47 // pred_region
          %387 = dma.done %s380, 128
        $region52: #{tpu_custom_call.1} parent=47 // pred_fallthru
          _
        %s388 = sand.u32 %s30, 1
        %s389 = scalar_lea.sflag [#allocation10], %s388
        %s390 = sand.u32 %s87, 1
        %s391 = smul.addr %s390, 128
        %s392 = scalar_lea.vmem [#allocation9], %s391
        // Predicated region
        $region53: #{tpu_custom_call.1} parent=47 // pred_check
          %p393 = pneg %p100
        $region54: #{tpu_custom_call.1} parent=47 // pred_check_branch
          %395 = sbr.rel (%p393) target = $region56
        $region55: #{tpu_custom_call.1} parent=47 // pred_region
          %396 = dma.done %s389, 2048
        $region56: #{tpu_custom_call.1} parent=47 // pred_fallthru
          _
        %s397 = sand.u32 %s30, 1
        %s398 = scalar_lea.sflag [#allocation10], %s397
        %s399 = sand.u32 %s115, 1
        %s400 = smul.addr %s399, 128
        %s401 = scalar_lea.vmem [#allocation11], %s400
        // Predicated region
        $region57: #{tpu_custom_call.1} parent=47 // pred_check
          %p402 = pneg %p128
        $region58: #{tpu_custom_call.1} parent=47 // pred_check_branch
          %404 = sbr.rel (%p402) target = $region60
        $region59: #{tpu_custom_call.1} parent=47 // pred_region
          %405 = dma.done %s398, 2048
        $region60: #{tpu_custom_call.1} parent=47 // pred_fallthru
          _
        %s406 = sand.u32 %s30, 1
        %s407 = scalar_lea.sflag [#allocation13], %s406
        %s408 = sand.u32 %s145, 1
        %s409 = smul.addr %s408, 8
        %s410 = scalar_lea.vmem [#allocation12], %s409
        // Predicated region
        $region61: #{tpu_custom_call.1} parent=47 // pred_check
          %p411 = pneg %p158
        $region62: #{tpu_custom_call.1} parent=47 // pred_check_branch
          %413 = sbr.rel (%p411) target = $region64
        $region63: #{tpu_custom_call.1} parent=47 // pred_region
          %414 = dma.done %s407, 128
        $region64: #{tpu_custom_call.1} parent=47 // pred_fallthru
          _
        // Predicated region
        $region65: #{tpu_custom_call.1} parent=47 // pred_check
          %p415 = pneg %p200
        $region66: #{tpu_custom_call.1} parent=47 // pred_check_branch
          %417 = sbr.rel (%p415) target = $region68
        $region67: #{tpu_custom_call.1} parent=47 // pred_region
          %418 = dma.done [#allocation13], 2048
        $region68: #{tpu_custom_call.1} parent=47 // pred_fallthru
          _
        %s419 = sand.u32 %s59, 1
        %s420 = scalar_lea.sflag [#allocation7], %s419
        %s421 = sand.u32 %s59, 1
        %s422 = smul.addr %s421, 8
        %s423 = scalar_lea.vmem [#allocation6], %s422
        %p424 = pneg %p72
        %p425 = pneg %p69
        %s426 = sand.u32 %s30, 1
        %s427 = scalar_lea.sflag [#allocation10], %s426
        %s428 = sand.u32 %s87, 1
        %s429 = smul.addr %s428, 128
        %s430 = scalar_lea.vmem [#allocation9], %s429
        %p431 = pneg %p100
        %p432 = pneg %p97
        %s433 = sand.u32 %s30, 1
        %s434 = scalar_lea.sflag [#allocation10], %s433
        %s435 = sand.u32 %s115, 1
        %s436 = smul.addr %s435, 128
        %s437 = scalar_lea.vmem [#allocation11], %s436
        %p438 = pneg %p128
        %p439 = pneg %p125
        %s440 = sand.u32 %s30, 1
        %s441 = scalar_lea.sflag [#allocation13], %s440
        %s442 = sand.u32 %s145, 1
        %s443 = smul.addr %s442, 8
        %s444 = scalar_lea.vmem [#allocation12], %s443
        %p445 = pneg %p158
        %p446 = pneg %p155
        %p447 = pneg %p179
        %p448 = pneg %p176
        %p449 = pneg %p200
        %p450 = pneg %p197
        %p451 = pneg %p221
        %p452 = pneg %p218
        %p453 = pneg %p249
        %p454 = pneg %p246
        %s455 = sand.u32 %s236, 1
        %s456 = scalar_lea.sflag [#allocation8], %s455
        %s457 = sand.u32 %s236, 1
        %s458 = smul.addr %s457, 8
        %s459 = scalar_lea.vmem [#allocation15], %s458
        %s460 = smul.u32 16, %s37
        %s461 = smul.u32 16, %s37
        %p463 = scmp.eq.s32.totalorder %s37, 0
        // Predicated region
        $region69: #{tpu_custom_call.1} parent=47 // pred_check
          %p464 = pneg %p463
        $region70: #{tpu_custom_call.1} parent=47 // pred_check_branch
          %466 = sbr.rel (%p464) target = $region72
        $region71: #{tpu_custom_call.1} parent=47 // pred_region
          %vm467 = vcmask 7168
          %468 = vst.msk [vmem:[#allocation2] sm:$0xff] %vm467, -inf
          %469 = vst.msk [vmem:[#allocation3] sm:$0xff] %vm467, 0.0
          %470 = vst [vmem:[#allocation4] sm:$0xff] 0.0
        $region72: #{tpu_custom_call.1} parent=47 // pred_fallthru
          _
        %v471 = vld [vmem:[%s383] sm:$0xff]
        %v472 = vld [vmem:[%s392] sm:$0xff]
        %v473 = vld [vmem:[%s392 + $0x8] sm:$0xff]
        %v474 = vld [vmem:[%s392 + $0x10] sm:$0xff]
        %v475 = vld [vmem:[%s392 + $0x18] sm:$0xff]
        %v476 = vld [vmem:[%s392 + $0x20] sm:$0xff]
        %v477 = vld [vmem:[%s392 + $0x28] sm:$0xff]
        %v478 = vld [vmem:[%s392 + $0x30] sm:$0xff]
        %v479 = vld [vmem:[%s392 + $0x38] sm:$0xff]
        %v480 = vld [vmem:[%s392 + $0x40] sm:$0xff]
        %v481 = vld [vmem:[%s392 + $0x48] sm:$0xff]
        %v482 = vld [vmem:[%s392 + $0x50] sm:$0xff]
        %v483 = vld [vmem:[%s392 + $0x58] sm:$0xff]
        %v484 = vld [vmem:[%s392 + $0x60] sm:$0xff]
        %v485 = vld [vmem:[%s392 + $0x68] sm:$0xff]
        %v486 = vld [vmem:[%s392 + $0x70] sm:$0xff]
        %v487 = vld [vmem:[%s392 + $0x78] sm:$0xff]
        %v488 = vld [vmem:[%s401] sm:$0xff]
        %v489 = vld [vmem:[%s401 + $0x8] sm:$0xff]
        %v490 = vld [vmem:[%s401 + $0x10] sm:$0xff]
        %v491 = vld [vmem:[%s401 + $0x18] sm:$0xff]
        %v492 = vld [vmem:[%s401 + $0x20] sm:$0xff]
        %v493 = vld [vmem:[%s401 + $0x28] sm:$0xff]
        %v494 = vld [vmem:[%s401 + $0x30] sm:$0xff]
        %v495 = vld [vmem:[%s401 + $0x38] sm:$0xff]
        %v496 = vld [vmem:[%s401 + $0x40] sm:$0xff]
        %v497 = vld [vmem:[%s401 + $0x48] sm:$0xff]
        %v498 = vld [vmem:[%s401 + $0x50] sm:$0xff]
        %v499 = vld [vmem:[%s401 + $0x58] sm:$0xff]
        %v500 = vld [vmem:[%s401 + $0x60] sm:$0xff]
        %v501 = vld [vmem:[%s401 + $0x68] sm:$0xff]
        %v502 = vld [vmem:[%s401 + $0x70] sm:$0xff]
        %v503 = vld [vmem:[%s401 + $0x78] sm:$0xff]
        %v504 = vld [vmem:[%s4] sm:$0x1]
        %v506 = vcombine.high %v471, %v471
        %v508 = vunpack.c.l.s4 1966171168
        %v509 = vunpack.c.0.s8 %v508
        %v510 = vlaneseq
        %v511 = vshrl.u32 %v510, 7
        %v512 = vsub.s32 %v509, %v511
        %v513 = vrot.slane %v471, %v512
        %v515 = vunpack.c.l.s4 1966171168
        %v516 = vunpack.c.0.s8 %v515
        %v517 = vlaneseq
        %v518 = vshrl.u32 %v517, 7
        %v519 = vsub.s32 %v516, %v518
        %v520 = vrot.slane %v506, %v519
        %v521 = vcombine.high %v513, %v513
        %v522 = vcombine.high %v520, %v520
        %v524 = vunpack.c.l.s4 1966171168
        %v525 = vunpack.c.0.s8 %v524
        %v526 = vlaneseq
        %v527 = vshrl.u32 %v526, 7
        %v528 = vsub.s32 %v525, %v527
        %v529 = vrot.slane %v513, %v528
        %v531 = vunpack.c.l.s4 1966171168
        %v532 = vunpack.c.0.s8 %v531
        %v533 = vlaneseq
        %v534 = vshrl.u32 %v533, 7
        %v535 = vsub.s32 %v532, %v534
        %v536 = vrot.slane %v520, %v535
        %v538 = vunpack.c.l.s4 1966171168
        %v539 = vunpack.c.0.s8 %v538
        %v540 = vlaneseq
        %v541 = vshrl.u32 %v540, 7
        %v542 = vsub.s32 %v539, %v541
        %v543 = vrot.slane %v521, %v542
        %v545 = vunpack.c.l.s4 1966171168
        %v546 = vunpack.c.0.s8 %v545
        %v547 = vlaneseq
        %v548 = vshrl.u32 %v547, 7
        %v549 = vsub.s32 %v546, %v548
        %v550 = vrot.slane %v522, %v549
        %v551 = vcombine.high %v529, %v529
        %v552 = vcombine.high %v536, %v536
        %v553 = vcombine.high %v543, %v543
        %v554 = vcombine.high %v550, %v550
        %v555 = vlaneseq
        %v556 = vshrl.u32 %v555, 7
        %v557 = vsub.s32 0, %v556
        %v558 = vrot.slane %v529, %v557
        %v559 = vlaneseq
        %v560 = vshrl.u32 %v559, 7
        %v561 = vsub.s32 0, %v560
        %v562 = vrot.slane %v543, %v561
        %v563 = vlaneseq
        %v564 = vshrl.u32 %v563, 7
        %v565 = vsub.s32 0, %v564
        %v566 = vrot.slane %v551, %v565
        %v567 = vlaneseq
        %v568 = vshrl.u32 %v567, 7
        %v569 = vsub.s32 0, %v568
        %v570 = vrot.slane %v553, %v569
        %v571 = vlaneseq
        %v572 = vshrl.u32 %v571, 7
        %v573 = vsub.s32 0, %v572
        %v574 = vrot.slane %v536, %v573
        %v575 = vlaneseq
        %v576 = vshrl.u32 %v575, 7
        %v577 = vsub.s32 0, %v576
        %v578 = vrot.slane %v550, %v577
        %v579 = vlaneseq
        %v580 = vshrl.u32 %v579, 7
        %v581 = vsub.s32 0, %v580
        %v582 = vrot.slane %v552, %v581
        %v583 = vlaneseq
        %v584 = vshrl.u32 %v583, 7
        %v585 = vsub.s32 0, %v584
        %v586 = vrot.slane %v554, %v585
        %v595 = vadd.f32 %v558, %v472
        %v596 = vadd.f32 %v558, %v473
        %v597 = vadd.f32 %v558, %v474
        %v598 = vadd.f32 %v558, %v475
        %v599 = vadd.f32 %v558, %v476
        %v600 = vadd.f32 %v558, %v477
        %v601 = vadd.f32 %v558, %v478
        %v602 = vadd.f32 %v558, %v479
        %v603 = vadd.f32 %v558, %v480
        %v604 = vadd.f32 %v558, %v481
        %v605 = vadd.f32 %v558, %v482
        %v606 = vadd.f32 %v558, %v483
        %v607 = vadd.f32 %v558, %v484
        %v608 = vadd.f32 %v558, %v485
        %v609 = vadd.f32 %v558, %v486
        %v610 = vadd.f32 %v558, %v487
        %v611 = vadd.f32 %v562, %v472
        %v612 = vadd.f32 %v562, %v473
        %v613 = vadd.f32 %v562, %v474
        %v614 = vadd.f32 %v562, %v475
        %v615 = vadd.f32 %v562, %v476
        %v616 = vadd.f32 %v562, %v477
        %v617 = vadd.f32 %v562, %v478
        %v618 = vadd.f32 %v562, %v479
        %v619 = vadd.f32 %v562, %v480
        %v620 = vadd.f32 %v562, %v481
        %v621 = vadd.f32 %v562, %v482
        %v622 = vadd.f32 %v562, %v483
        %v623 = vadd.f32 %v562, %v484
        %v624 = vadd.f32 %v562, %v485
        %v625 = vadd.f32 %v562, %v486
        %v626 = vadd.f32 %v562, %v487
        %v627 = vadd.f32 %v566, %v472
        %v628 = vadd.f32 %v566, %v473
        %v629 = vadd.f32 %v566, %v474
        %v630 = vadd.f32 %v566, %v475
        %v631 = vadd.f32 %v566, %v476
        %v632 = vadd.f32 %v566, %v477
        %v633 = vadd.f32 %v566, %v478
        %v634 = vadd.f32 %v566, %v479
        %v635 = vadd.f32 %v566, %v480
        %v636 = vadd.f32 %v566, %v481
        %v637 = vadd.f32 %v566, %v482
        %v638 = vadd.f32 %v566, %v483
        %v639 = vadd.f32 %v566, %v484
        %v640 = vadd.f32 %v566, %v485
        %v641 = vadd.f32 %v566, %v486
        %v642 = vadd.f32 %v566, %v487
        %v643 = vadd.f32 %v570, %v472
        %v644 = vadd.f32 %v570, %v473
        %v645 = vadd.f32 %v570, %v474
        %v646 = vadd.f32 %v570, %v475
        %v647 = vadd.f32 %v570, %v476
        %v648 = vadd.f32 %v570, %v477
        %v649 = vadd.f32 %v570, %v478
        %v650 = vadd.f32 %v570, %v479
        %v651 = vadd.f32 %v570, %v480
        %v652 = vadd.f32 %v570, %v481
        %v653 = vadd.f32 %v570, %v482
        %v654 = vadd.f32 %v570, %v483
        %v655 = vadd.f32 %v570, %v484
        %v656 = vadd.f32 %v570, %v485
        %v657 = vadd.f32 %v570, %v486
        %v658 = vadd.f32 %v570, %v487
        %v659 = vadd.f32 %v574, %v472
        %v660 = vadd.f32 %v574, %v473
        %v661 = vadd.f32 %v574, %v474
        %v662 = vadd.f32 %v574, %v475
        %v663 = vadd.f32 %v574, %v476
        %v664 = vadd.f32 %v574, %v477
        %v665 = vadd.f32 %v574, %v478
        %v666 = vadd.f32 %v574, %v479
        %v667 = vadd.f32 %v574, %v480
        %v668 = vadd.f32 %v574, %v481
        %v669 = vadd.f32 %v574, %v482
        %v670 = vadd.f32 %v574, %v483
        %v671 = vadd.f32 %v574, %v484
        %v672 = vadd.f32 %v574, %v485
        %v673 = vadd.f32 %v574, %v486
        %v674 = vadd.f32 %v574, %v487
        %v675 = vadd.f32 %v578, %v472
        %v676 = vadd.f32 %v578, %v473
        %v677 = vadd.f32 %v578, %v474
        %v678 = vadd.f32 %v578, %v475
        %v679 = vadd.f32 %v578, %v476
        %v680 = vadd.f32 %v578, %v477
        %v681 = vadd.f32 %v578, %v478
        %v682 = vadd.f32 %v578, %v479
        %v683 = vadd.f32 %v578, %v480
        %v684 = vadd.f32 %v578, %v481
        %v685 = vadd.f32 %v578, %v482
        %v686 = vadd.f32 %v578, %v483
        %v687 = vadd.f32 %v578, %v484
        %v688 = vadd.f32 %v578, %v485
        %v689 = vadd.f32 %v578, %v486
        %v690 = vadd.f32 %v578, %v487
        %v691 = vadd.f32 %v582, %v472
        %v692 = vadd.f32 %v582, %v473
        %v693 = vadd.f32 %v582, %v474
        %v694 = vadd.f32 %v582, %v475
        %v695 = vadd.f32 %v582, %v476
        %v696 = vadd.f32 %v582, %v477
        %v697 = vadd.f32 %v582, %v478
        %v698 = vadd.f32 %v582, %v479
        %v699 = vadd.f32 %v582, %v480
        %v700 = vadd.f32 %v582, %v481
        %v701 = vadd.f32 %v582, %v482
        %v702 = vadd.f32 %v582, %v483
        %v703 = vadd.f32 %v582, %v484
        %v704 = vadd.f32 %v582, %v485
        %v705 = vadd.f32 %v582, %v486
        %v706 = vadd.f32 %v582, %v487
        %v707 = vadd.f32 %v586, %v472
        %v708 = vadd.f32 %v586, %v473
        %v709 = vadd.f32 %v586, %v474
        %v710 = vadd.f32 %v586, %v475
        %v711 = vadd.f32 %v586, %v476
        %v712 = vadd.f32 %v586, %v477
        %v713 = vadd.f32 %v586, %v478
        %v714 = vadd.f32 %v586, %v479
        %v715 = vadd.f32 %v586, %v480
        %v716 = vadd.f32 %v586, %v481
        %v717 = vadd.f32 %v586, %v482
        %v718 = vadd.f32 %v586, %v483
        %v719 = vadd.f32 %v586, %v484
        %v720 = vadd.f32 %v586, %v485
        %v721 = vadd.f32 %v586, %v486
        %v722 = vadd.f32 %v586, %v487
        %v723 = vtanh.pop %v595
        %v724 = vtanh.pop %v596
        %v725 = vtanh.pop %v597
        %v726 = vtanh.pop %v598
        %v727 = vtanh.pop %v599
        %v728 = vtanh.pop %v600
        %v729 = vtanh.pop %v601
        %v730 = vtanh.pop %v602
        %v731 = vtanh.pop %v603
        %v732 = vtanh.pop %v604
        %v733 = vtanh.pop %v605
        %v734 = vtanh.pop %v606
        %v735 = vtanh.pop %v607
        %v736 = vtanh.pop %v608
        %v737 = vtanh.pop %v609
        %v738 = vtanh.pop %v610
        %v739 = vtanh.pop %v611
        %v740 = vtanh.pop %v612
        %v741 = vtanh.pop %v613
        %v742 = vtanh.pop %v614
        %v743 = vtanh.pop %v615
        %v744 = vtanh.pop %v616
        %v745 = vtanh.pop %v617
        %v746 = vtanh.pop %v618
        %v747 = vtanh.pop %v619
        %v748 = vtanh.pop %v620
        %v749 = vtanh.pop %v621
        %v750 = vtanh.pop %v622
        %v751 = vtanh.pop %v623
        %v752 = vtanh.pop %v624
        %v753 = vtanh.pop %v625
        %v754 = vtanh.pop %v626
        %v755 = vtanh.pop %v627
        %v756 = vtanh.pop %v628
        %v757 = vtanh.pop %v629
        %v758 = vtanh.pop %v630
        %v759 = vtanh.pop %v631
        %v760 = vtanh.pop %v632
        %v761 = vtanh.pop %v633
        %v762 = vtanh.pop %v634
        %v763 = vtanh.pop %v635
        %v764 = vtanh.pop %v636
        %v765 = vtanh.pop %v637
        %v766 = vtanh.pop %v638
        %v767 = vtanh.pop %v639
        %v768 = vtanh.pop %v640
        %v769 = vtanh.pop %v641
        %v770 = vtanh.pop %v642
        %v771 = vtanh.pop %v643
        %v772 = vtanh.pop %v644
        %v773 = vtanh.pop %v645
        %v774 = vtanh.pop %v646
        %v775 = vtanh.pop %v647
        %v776 = vtanh.pop %v648
        %v777 = vtanh.pop %v649
        %v778 = vtanh.pop %v650
        %v779 = vtanh.pop %v651
        %v780 = vtanh.pop %v652
        %v781 = vtanh.pop %v653
        %v782 = vtanh.pop %v654
        %v783 = vtanh.pop %v655
        %v784 = vtanh.pop %v656
        %v785 = vtanh.pop %v657
        %v786 = vtanh.pop %v658
        %v787 = vtanh.pop %v659
        %v788 = vtanh.pop %v660
        %v789 = vtanh.pop %v661
        %v790 = vtanh.pop %v662
        %v791 = vtanh.pop %v663
        %v792 = vtanh.pop %v664
        %v793 = vtanh.pop %v665
        %v794 = vtanh.pop %v666
        %v795 = vtanh.pop %v667
        %v796 = vtanh.pop %v668
        %v797 = vtanh.pop %v669
        %v798 = vtanh.pop %v670
        %v799 = vtanh.pop %v671
        %v800 = vtanh.pop %v672
        %v801 = vtanh.pop %v673
        %v802 = vtanh.pop %v674
        %v803 = vtanh.pop %v675
        %v804 = vtanh.pop %v676
        %v805 = vtanh.pop %v677
        %v806 = vtanh.pop %v678
        %v807 = vtanh.pop %v679
        %v808 = vtanh.pop %v680
        %v809 = vtanh.pop %v681
        %v810 = vtanh.pop %v682
        %v811 = vtanh.pop %v683
        %v812 = vtanh.pop %v684
        %v813 = vtanh.pop %v685
        %v814 = vtanh.pop %v686
        %v815 = vtanh.pop %v687
        %v816 = vtanh.pop %v688
        %v817 = vtanh.pop %v689
        %v818 = vtanh.pop %v690
        %v819 = vtanh.pop %v691
        %v820 = vtanh.pop %v692
        %v821 = vtanh.pop %v693
        %v822 = vtanh.pop %v694
        %v823 = vtanh.pop %v695
        %v824 = vtanh.pop %v696
        %v825 = vtanh.pop %v697
        %v826 = vtanh.pop %v698
        %v827 = vtanh.pop %v699
        %v828 = vtanh.pop %v700
        %v829 = vtanh.pop %v701
        %v830 = vtanh.pop %v702
        %v831 = vtanh.pop %v703
        %v832 = vtanh.pop %v704
        %v833 = vtanh.pop %v705
        %v834 = vtanh.pop %v706
        %v835 = vtanh.pop %v707
        %v836 = vtanh.pop %v708
        %v837 = vtanh.pop %v709
        %v838 = vtanh.pop %v710
        %v839 = vtanh.pop %v711
        %v840 = vtanh.pop %v712
        %v841 = vtanh.pop %v713
        %v842 = vtanh.pop %v714
        %v843 = vtanh.pop %v715
        %v844 = vtanh.pop %v716
        %v845 = vtanh.pop %v717
        %v846 = vtanh.pop %v718
        %v847 = vtanh.pop %v719
        %v848 = vtanh.pop %v720
        %v849 = vtanh.pop %v721
        %v850 = vtanh.pop %v722
        %v852 = vlaneseq
        %v853 = vshrl.u32 %v852, 7
        %v854 = vsub.s32 0, %v853
        %v855 = vrot.slane %v504, %v854
        %v857 = vmul.f32 %v723, %v855
        %v858 = vmul.f32 %v724, %v855
        %v859 = vmul.f32 %v725, %v855
        %v860 = vmul.f32 %v726, %v855
        %v861 = vmul.f32 %v727, %v855
        %v862 = vmul.f32 %v728, %v855
        %v863 = vmul.f32 %v729, %v855
        %v864 = vmul.f32 %v730, %v855
        %v865 = vmul.f32 %v731, %v855
        %v866 = vmul.f32 %v732, %v855
        %v867 = vmul.f32 %v733, %v855
        %v868 = vmul.f32 %v734, %v855
        %v869 = vmul.f32 %v735, %v855
        %v870 = vmul.f32 %v736, %v855
        %v871 = vmul.f32 %v737, %v855
        %v872 = vmul.f32 %v738, %v855
        %v873 = vmul.f32 %v739, %v855
        %v874 = vmul.f32 %v740, %v855
        %v875 = vmul.f32 %v741, %v855
        %v876 = vmul.f32 %v742, %v855
        %v877 = vmul.f32 %v743, %v855
        %v878 = vmul.f32 %v744, %v855
        %v879 = vmul.f32 %v745, %v855
        %v880 = vmul.f32 %v746, %v855
        %v881 = vmul.f32 %v747, %v855
        %v882 = vmul.f32 %v748, %v855
        %v883 = vmul.f32 %v749, %v855
        %v884 = vmul.f32 %v750, %v855
        %v885 = vmul.f32 %v751, %v855
        %v886 = vmul.f32 %v752, %v855
        %v887 = vmul.f32 %v753, %v855
        %v888 = vmul.f32 %v754, %v855
        %v889 = vmul.f32 %v755, %v855
        %v890 = vmul.f32 %v756, %v855
        %v891 = vmul.f32 %v757, %v855
        %v892 = vmul.f32 %v758, %v855
        %v893 = vmul.f32 %v759, %v855
        %v894 = vmul.f32 %v760, %v855
        %v895 = vmul.f32 %v761, %v855
        %v896 = vmul.f32 %v762, %v855
        %v897 = vmul.f32 %v763, %v855
        %v898 = vmul.f32 %v764, %v855
        %v899 = vmul.f32 %v765, %v855
        %v900 = vmul.f32 %v766, %v855
        %v901 = vmul.f32 %v767, %v855
        %v902 = vmul.f32 %v768, %v855
        %v903 = vmul.f32 %v769, %v855
        %v904 = vmul.f32 %v770, %v855
        %v905 = vmul.f32 %v771, %v855
        %v906 = vmul.f32 %v772, %v855
        %v907 = vmul.f32 %v773, %v855
        %v908 = vmul.f32 %v774, %v855
        %v909 = vmul.f32 %v775, %v855
        %v910 = vmul.f32 %v776, %v855
        %v911 = vmul.f32 %v777, %v855
        %v912 = vmul.f32 %v778, %v855
        %v913 = vmul.f32 %v779, %v855
        %v914 = vmul.f32 %v780, %v855
        %v915 = vmul.f32 %v781, %v855
        %v916 = vmul.f32 %v782, %v855
        %v917 = vmul.f32 %v783, %v855
        %v918 = vmul.f32 %v784, %v855
        %v919 = vmul.f32 %v785, %v855
        %v920 = vmul.f32 %v786, %v855
        %v921 = vmul.f32 %v787, %v855
        %v922 = vmul.f32 %v788, %v855
        %v923 = vmul.f32 %v789, %v855
        %v924 = vmul.f32 %v790, %v855
        %v925 = vmul.f32 %v791, %v855
        %v926 = vmul.f32 %v792, %v855
        %v927 = vmul.f32 %v793, %v855
        %v928 = vmul.f32 %v794, %v855
        %v929 = vmul.f32 %v795, %v855
        %v930 = vmul.f32 %v796, %v855
        %v931 = vmul.f32 %v797, %v855
        %v932 = vmul.f32 %v798, %v855
        %v933 = vmul.f32 %v799, %v855
        %v934 = vmul.f32 %v800, %v855
        %v935 = vmul.f32 %v801, %v855
        %v936 = vmul.f32 %v802, %v855
        %v937 = vmul.f32 %v803, %v855
        %v938 = vmul.f32 %v804, %v855
        %v939 = vmul.f32 %v805, %v855
        %v940 = vmul.f32 %v806, %v855
        %v941 = vmul.f32 %v807, %v855
        %v942 = vmul.f32 %v808, %v855
        %v943 = vmul.f32 %v809, %v855
        %v944 = vmul.f32 %v810, %v855
        %v945 = vmul.f32 %v811, %v855
        %v946 = vmul.f32 %v812, %v855
        %v947 = vmul.f32 %v813, %v855
        %v948 = vmul.f32 %v814, %v855
        %v949 = vmul.f32 %v815, %v855
        %v950 = vmul.f32 %v816, %v855
        %v951 = vmul.f32 %v817, %v855
        %v952 = vmul.f32 %v818, %v855
        %v953 = vmul.f32 %v819, %v855
        %v954 = vmul.f32 %v820, %v855
        %v955 = vmul.f32 %v821, %v855
        %v956 = vmul.f32 %v822, %v855
        %v957 = vmul.f32 %v823, %v855
        %v958 = vmul.f32 %v824, %v855
        %v959 = vmul.f32 %v825, %v855
        %v960 = vmul.f32 %v826, %v855
        %v961 = vmul.f32 %v827, %v855
        %v962 = vmul.f32 %v828, %v855
        %v963 = vmul.f32 %v829, %v855
        %v964 = vmul.f32 %v830, %v855
        %v965 = vmul.f32 %v831, %v855
        %v966 = vmul.f32 %v832, %v855
        %v967 = vmul.f32 %v833, %v855
        %v968 = vmul.f32 %v834, %v855
        %v969 = vmul.f32 %v835, %v855
        %v970 = vmul.f32 %v836, %v855
        %v971 = vmul.f32 %v837, %v855
        %v972 = vmul.f32 %v838, %v855
        %v973 = vmul.f32 %v839, %v855
        %v974 = vmul.f32 %v840, %v855
        %v975 = vmul.f32 %v841, %v855
        %v976 = vmul.f32 %v842, %v855
        %v977 = vmul.f32 %v843, %v855
        %v978 = vmul.f32 %v844, %v855
        %v979 = vmul.f32 %v845, %v855
        %v980 = vmul.f32 %v846, %v855
        %v981 = vmul.f32 %v847, %v855
        %v982 = vmul.f32 %v848, %v855
        %v983 = vmul.f32 %v849, %v855
        %v984 = vmul.f32 %v850, %v855
        %985 = vadd.xlane.f32.xlu0 %v857
        %v986 = vpop.xlane.xlu0 %985
        %987 = vadd.xlane.f32.xlu0 %v858
        %v988 = vpop.xlane.xlu0 %987
        %989 = vadd.xlane.f32.xlu0 %v859
        %v990 = vpop.xlane.xlu0 %989
        %991 = vadd.xlane.f32.xlu0 %v860
        %v992 = vpop.xlane.xlu0 %991
        %993 = vadd.xlane.f32.xlu0 %v861
        %v994 = vpop.xlane.xlu0 %993
        %995 = vadd.xlane.f32.xlu0 %v862
        %v996 = vpop.xlane.xlu0 %995
        %997 = vadd.xlane.f32.xlu0 %v863
        %v998 = vpop.xlane.xlu0 %997
        %999 = vadd.xlane.f32.xlu0 %v864
        %v1000 = vpop.xlane.xlu0 %999
        %1001 = vadd.xlane.f32.xlu0 %v865
        %v1002 = vpop.xlane.xlu0 %1001
        %1003 = vadd.xlane.f32.xlu0 %v866
        %v1004 = vpop.xlane.xlu0 %1003
        %1005 = vadd.xlane.f32.xlu0 %v867
        %v1006 = vpop.xlane.xlu0 %1005
        %1007 = vadd.xlane.f32.xlu0 %v868
        %v1008 = vpop.xlane.xlu0 %1007
        %1009 = vadd.xlane.f32.xlu0 %v869
        %v1010 = vpop.xlane.xlu0 %1009
        %1011 = vadd.xlane.f32.xlu0 %v870
        %v1012 = vpop.xlane.xlu0 %1011
        %1013 = vadd.xlane.f32.xlu0 %v871
        %v1014 = vpop.xlane.xlu0 %1013
        %1015 = vadd.xlane.f32.xlu0 %v872
        %v1016 = vpop.xlane.xlu0 %1015
        %1017 = vadd.xlane.f32.xlu0 %v873
        %v1018 = vpop.xlane.xlu0 %1017
        %1019 = vadd.xlane.f32.xlu0 %v874
        %v1020 = vpop.xlane.xlu0 %1019
        %1021 = vadd.xlane.f32.xlu0 %v875
        %v1022 = vpop.xlane.xlu0 %1021
        %1023 = vadd.xlane.f32.xlu0 %v876
        %v1024 = vpop.xlane.xlu0 %1023
        %1025 = vadd.xlane.f32.xlu0 %v877
        %v1026 = vpop.xlane.xlu0 %1025
        %1027 = vadd.xlane.f32.xlu0 %v878
        %v1028 = vpop.xlane.xlu0 %1027
        %1029 = vadd.xlane.f32.xlu0 %v879
        %v1030 = vpop.xlane.xlu0 %1029
        %1031 = vadd.xlane.f32.xlu0 %v880
        %v1032 = vpop.xlane.xlu0 %1031
        %1033 = vadd.xlane.f32.xlu0 %v881
        %v1034 = vpop.xlane.xlu0 %1033
        %1035 = vadd.xlane.f32.xlu0 %v882
        %v1036 = vpop.xlane.xlu0 %1035
        %1037 = vadd.xlane.f32.xlu0 %v883
        %v1038 = vpop.xlane.xlu0 %1037
        %1039 = vadd.xlane.f32.xlu0 %v884
        %v1040 = vpop.xlane.xlu0 %1039
        %1041 = vadd.xlane.f32.xlu0 %v885
        %v1042 = vpop.xlane.xlu0 %1041
        %1043 = vadd.xlane.f32.xlu0 %v886
        %v1044 = vpop.xlane.xlu0 %1043
        %1045 = vadd.xlane.f32.xlu0 %v887
        %v1046 = vpop.xlane.xlu0 %1045
        %1047 = vadd.xlane.f32.xlu0 %v888
        %v1048 = vpop.xlane.xlu0 %1047
        %1049 = vadd.xlane.f32.xlu0 %v889
        %v1050 = vpop.xlane.xlu0 %1049
        %1051 = vadd.xlane.f32.xlu0 %v890
        %v1052 = vpop.xlane.xlu0 %1051
        %1053 = vadd.xlane.f32.xlu0 %v891
        %v1054 = vpop.xlane.xlu0 %1053
        %1055 = vadd.xlane.f32.xlu0 %v892
        %v1056 = vpop.xlane.xlu0 %1055
        %1057 = vadd.xlane.f32.xlu0 %v893
        %v1058 = vpop.xlane.xlu0 %1057
        %1059 = vadd.xlane.f32.xlu0 %v894
        %v1060 = vpop.xlane.xlu0 %1059
        %1061 = vadd.xlane.f32.xlu0 %v895
        %v1062 = vpop.xlane.xlu0 %1061
        %1063 = vadd.xlane.f32.xlu0 %v896
        %v1064 = vpop.xlane.xlu0 %1063
        %1065 = vadd.xlane.f32.xlu0 %v897
        %v1066 = vpop.xlane.xlu0 %1065
        %1067 = vadd.xlane.f32.xlu0 %v898
        %v1068 = vpop.xlane.xlu0 %1067
        %1069 = vadd.xlane.f32.xlu0 %v899
        %v1070 = vpop.xlane.xlu0 %1069
        %1071 = vadd.xlane.f32.xlu0 %v900
        %v1072 = vpop.xlane.xlu0 %1071
        %1073 = vadd.xlane.f32.xlu0 %v901
        %v1074 = vpop.xlane.xlu0 %1073
        %1075 = vadd.xlane.f32.xlu0 %v902
        %v1076 = vpop.xlane.xlu0 %1075
        %1077 = vadd.xlane.f32.xlu0 %v903
        %v1078 = vpop.xlane.xlu0 %1077
        %1079 = vadd.xlane.f32.xlu0 %v904
        %v1080 = vpop.xlane.xlu0 %1079
        %1081 = vadd.xlane.f32.xlu0 %v905
        %v1082 = vpop.xlane.xlu0 %1081
        %1083 = vadd.xlane.f32.xlu0 %v906
        %v1084 = vpop.xlane.xlu0 %1083
        %1085 = vadd.xlane.f32.xlu0 %v907
        %v1086 = vpop.xlane.xlu0 %1085
        %1087 = vadd.xlane.f32.xlu0 %v908
        %v1088 = vpop.xlane.xlu0 %1087
        %1089 = vadd.xlane.f32.xlu0 %v909
        %v1090 = vpop.xlane.xlu0 %1089
        %1091 = vadd.xlane.f32.xlu0 %v910
        %v1092 = vpop.xlane.xlu0 %1091
        %1093 = vadd.xlane.f32.xlu0 %v911
        %v1094 = vpop.xlane.xlu0 %1093
        %1095 = vadd.xlane.f32.xlu0 %v912
        %v1096 = vpop.xlane.xlu0 %1095
        %1097 = vadd.xlane.f32.xlu0 %v913
        %v1098 = vpop.xlane.xlu0 %1097
        %1099 = vadd.xlane.f32.xlu0 %v914
        %v1100 = vpop.xlane.xlu0 %1099
        %1101 = vadd.xlane.f32.xlu0 %v915
        %v1102 = vpop.xlane.xlu0 %1101
        %1103 = vadd.xlane.f32.xlu0 %v916
        %v1104 = vpop.xlane.xlu0 %1103
        %1105 = vadd.xlane.f32.xlu0 %v917
        %v1106 = vpop.xlane.xlu0 %1105
        %1107 = vadd.xlane.f32.xlu0 %v918
        %v1108 = vpop.xlane.xlu0 %1107
        %1109 = vadd.xlane.f32.xlu0 %v919
        %v1110 = vpop.xlane.xlu0 %1109
        %1111 = vadd.xlane.f32.xlu0 %v920
        %v1112 = vpop.xlane.xlu0 %1111
        %1113 = vadd.xlane.f32.xlu0 %v921
        %v1114 = vpop.xlane.xlu0 %1113
        %1115 = vadd.xlane.f32.xlu0 %v922
        %v1116 = vpop.xlane.xlu0 %1115
        %1117 = vadd.xlane.f32.xlu0 %v923
        %v1118 = vpop.xlane.xlu0 %1117
        %1119 = vadd.xlane.f32.xlu0 %v924
        %v1120 = vpop.xlane.xlu0 %1119
        %1121 = vadd.xlane.f32.xlu0 %v925
        %v1122 = vpop.xlane.xlu0 %1121
        %1123 = vadd.xlane.f32.xlu0 %v926
        %v1124 = vpop.xlane.xlu0 %1123
        %1125 = vadd.xlane.f32.xlu0 %v927
        %v1126 = vpop.xlane.xlu0 %1125
        %1127 = vadd.xlane.f32.xlu0 %v928
        %v1128 = vpop.xlane.xlu0 %1127
        %1129 = vadd.xlane.f32.xlu0 %v929
        %v1130 = vpop.xlane.xlu0 %1129
        %1131 = vadd.xlane.f32.xlu0 %v930
        %v1132 = vpop.xlane.xlu0 %1131
        %1133 = vadd.xlane.f32.xlu0 %v931
        %v1134 = vpop.xlane.xlu0 %1133
        %1135 = vadd.xlane.f32.xlu0 %v932
        %v1136 = vpop.xlane.xlu0 %1135
        %1137 = vadd.xlane.f32.xlu0 %v933
        %v1138 = vpop.xlane.xlu0 %1137
        %1139 = vadd.xlane.f32.xlu0 %v934
        %v1140 = vpop.xlane.xlu0 %1139
        %1141 = vadd.xlane.f32.xlu0 %v935
        %v1142 = vpop.xlane.xlu0 %1141
        %1143 = vadd.xlane.f32.xlu0 %v936
        %v1144 = vpop.xlane.xlu0 %1143
        %1145 = vadd.xlane.f32.xlu0 %v937
        %v1146 = vpop.xlane.xlu0 %1145
        %1147 = vadd.xlane.f32.xlu0 %v938
        %v1148 = vpop.xlane.xlu0 %1147
        %1149 = vadd.xlane.f32.xlu0 %v939
        %v1150 = vpop.xlane.xlu0 %1149
        %1151 = vadd.xlane.f32.xlu0 %v940
        %v1152 = vpop.xlane.xlu0 %1151
        %1153 = vadd.xlane.f32.xlu0 %v941
        %v1154 = vpop.xlane.xlu0 %1153
        %1155 = vadd.xlane.f32.xlu0 %v942
        %v1156 = vpop.xlane.xlu0 %1155
        %1157 = vadd.xlane.f32.xlu0 %v943
        %v1158 = vpop.xlane.xlu0 %1157
        %1159 = vadd.xlane.f32.xlu0 %v944
        %v1160 = vpop.xlane.xlu0 %1159
        %1161 = vadd.xlane.f32.xlu0 %v945
        %v1162 = vpop.xlane.xlu0 %1161
        %1163 = vadd.xlane.f32.xlu0 %v946
        %v1164 = vpop.xlane.xlu0 %1163
        %1165 = vadd.xlane.f32.xlu0 %v947
        %v1166 = vpop.xlane.xlu0 %1165
        %1167 = vadd.xlane.f32.xlu0 %v948
        %v1168 = vpop.xlane.xlu0 %1167
        %1169 = vadd.xlane.f32.xlu0 %v949
        %v1170 = vpop.xlane.xlu0 %1169
        %1171 = vadd.xlane.f32.xlu0 %v950
        %v1172 = vpop.xlane.xlu0 %1171
        %1173 = vadd.xlane.f32.xlu0 %v951
        %v1174 = vpop.xlane.xlu0 %1173
        %1175 = vadd.xlane.f32.xlu0 %v952
        %v1176 = vpop.xlane.xlu0 %1175
        %1177 = vadd.xlane.f32.xlu0 %v953
        %v1178 = vpop.xlane.xlu0 %1177
        %1179 = vadd.xlane.f32.xlu0 %v954
        %v1180 = vpop.xlane.xlu0 %1179
        %1181 = vadd.xlane.f32.xlu0 %v955
        %v1182 = vpop.xlane.xlu0 %1181
        %1183 = vadd.xlane.f32.xlu0 %v956
        %v1184 = vpop.xlane.xlu0 %1183
        %1185 = vadd.xlane.f32.xlu0 %v957
        %v1186 = vpop.xlane.xlu0 %1185
        %1187 = vadd.xlane.f32.xlu0 %v958
        %v1188 = vpop.xlane.xlu0 %1187
        %1189 = vadd.xlane.f32.xlu0 %v959
        %v1190 = vpop.xlane.xlu0 %1189
        %1191 = vadd.xlane.f32.xlu0 %v960
        %v1192 = vpop.xlane.xlu0 %1191
        %1193 = vadd.xlane.f32.xlu0 %v961
        %v1194 = vpop.xlane.xlu0 %1193
        %1195 = vadd.xlane.f32.xlu0 %v962
        %v1196 = vpop.xlane.xlu0 %1195
        %1197 = vadd.xlane.f32.xlu0 %v963
        %v1198 = vpop.xlane.xlu0 %1197
        %1199 = vadd.xlane.f32.xlu0 %v964
        %v1200 = vpop.xlane.xlu0 %1199
        %1201 = vadd.xlane.f32.xlu0 %v965
        %v1202 = vpop.xlane.xlu0 %1201
        %1203 = vadd.xlane.f32.xlu0 %v966
        %v1204 = vpop.xlane.xlu0 %1203
        %1205 = vadd.xlane.f32.xlu0 %v967
        %v1206 = vpop.xlane.xlu0 %1205
        %1207 = vadd.xlane.f32.xlu0 %v968
        %v1208 = vpop.xlane.xlu0 %1207
        %1209 = vadd.xlane.f32.xlu0 %v969
        %v1210 = vpop.xlane.xlu0 %1209
        %1211 = vadd.xlane.f32.xlu0 %v970
        %v1212 = vpop.xlane.xlu0 %1211
        %1213 = vadd.xlane.f32.xlu0 %v971
        %v1214 = vpop.xlane.xlu0 %1213
        %1215 = vadd.xlane.f32.xlu0 %v972
        %v1216 = vpop.xlane.xlu0 %1215
        %1217 = vadd.xlane.f32.xlu0 %v973
        %v1218 = vpop.xlane.xlu0 %1217
        %1219 = vadd.xlane.f32.xlu0 %v974
        %v1220 = vpop.xlane.xlu0 %1219
        %1221 = vadd.xlane.f32.xlu0 %v975
        %v1222 = vpop.xlane.xlu0 %1221
        %1223 = vadd.xlane.f32.xlu0 %v976
        %v1224 = vpop.xlane.xlu0 %1223
        %1225 = vadd.xlane.f32.xlu0 %v977
        %v1226 = vpop.xlane.xlu0 %1225
        %1227 = vadd.xlane.f32.xlu0 %v978
        %v1228 = vpop.xlane.xlu0 %1227
        %1229 = vadd.xlane.f32.xlu0 %v979
        %v1230 = vpop.xlane.xlu0 %1229
        %1231 = vadd.xlane.f32.xlu0 %v980
        %v1232 = vpop.xlane.xlu0 %1231
        %1233 = vadd.xlane.f32.xlu0 %v981
        %v1234 = vpop.xlane.xlu0 %1233
        %1235 = vadd.xlane.f32.xlu0 %v982
        %v1236 = vpop.xlane.xlu0 %1235
        %1237 = vadd.xlane.f32.xlu0 %v983
        %v1238 = vpop.xlane.xlu0 %1237
        %1239 = vadd.xlane.f32.xlu0 %v984
        %v1240 = vpop.xlane.xlu0 %1239
        %v1369 = vlaneseq
        %v1370 = vand.u32 %v1369, 127
        %v1371 = vlaneseq
        %v1372 = vshrl.u32 %v1371, 7
        %v1373 = vsub.s32 %v1370, %v1372
        %v1374 = vrot.slane %v986, %v1373
        %v1375 = vadd.s32 %v1370, 4294967288
        %v1376 = vlaneseq
        %v1377 = vshrl.u32 %v1376, 7
        %v1378 = vsub.s32 %v1375, %v1377
        %v1379 = vrot.slane %v988, %v1378
        %vm1380 = vcmask 130112
        %v1381 = vsel %vm1380, %v1379, %v1374
        %v1382 = vadd.s32 %v1370, 4294967280
        %v1383 = vlaneseq
        %v1384 = vshrl.u32 %v1383, 7
        %v1385 = vsub.s32 %v1382, %v1384
        %v1386 = vrot.slane %v990, %v1385
        %vm1387 = vcmask 195712
        %v1388 = vsel %vm1387, %v1386, %v1381
        %v1389 = vadd.s32 %v1370, 4294967272
        %v1390 = vlaneseq
        %v1391 = vshrl.u32 %v1390, 7
        %v1392 = vsub.s32 %v1389, %v1391
        %v1393 = vrot.slane %v992, %v1392
        %vm1394 = vcmask 261312
        %v1395 = vsel %vm1394, %v1393, %v1388
        %v1396 = vadd.s32 %v1370, 4294967264
        %v1397 = vlaneseq
        %v1398 = vshrl.u32 %v1397, 7
        %v1399 = vsub.s32 %v1396, %v1398
        %v1400 = vrot.slane %v994, %v1399
        %vm1401 = vcmask 326912
        %v1402 = vsel %vm1401, %v1400, %v1395
        %v1403 = vadd.s32 %v1370, 4294967256
        %v1404 = vlaneseq
        %v1405 = vshrl.u32 %v1404, 7
        %v1406 = vsub.s32 %v1403, %v1405
        %v1407 = vrot.slane %v996, %v1406
        %vm1408 = vcmask 392512
        %v1409 = vsel %vm1408, %v1407, %v1402
        %v1410 = vadd.s32 %v1370, 4294967248
        %v1411 = vlaneseq
        %v1412 = vshrl.u32 %v1411, 7
        %v1413 = vsub.s32 %v1410, %v1412
        %v1414 = vrot.slane %v998, %v1413
        %vm1415 = vcmask 458112
        %v1416 = vsel %vm1415, %v1414, %v1409
        %v1417 = vadd.s32 %v1370, 4294967240
        %v1418 = vlaneseq
        %v1419 = vshrl.u32 %v1418, 7
        %v1420 = vsub.s32 %v1417, %v1419
        %v1421 = vrot.slane %v1000, %v1420
        %vm1422 = vcmask 523712
        %v1423 = vsel %vm1422, %v1421, %v1416
        %v1424 = vadd.s32 %v1370, 4294967232
        %v1425 = vlaneseq
        %v1426 = vshrl.u32 %v1425, 7
        %v1427 = vsub.s32 %v1424, %v1426
        %v1428 = vrot.slane %v1002, %v1427
        %vm1429 = vcmask 589312
        %v1430 = vsel %vm1429, %v1428, %v1423
        %v1431 = vadd.s32 %v1370, 4294967224
        %v1432 = vlaneseq
        %v1433 = vshrl.u32 %v1432, 7
        %v1434 = vsub.s32 %v1431, %v1433
        %v1435 = vrot.slane %v1004, %v1434
        %vm1436 = vcmask 654912
        %v1437 = vsel %vm1436, %v1435, %v1430
        %v1438 = vadd.s32 %v1370, 4294967216
        %v1439 = vlaneseq
        %v1440 = vshrl.u32 %v1439, 7
        %v1441 = vsub.s32 %v1438, %v1440
        %v1442 = vrot.slane %v1006, %v1441
        %vm1443 = vcmask 720512
        %v1444 = vsel %vm1443, %v1442, %v1437
        %v1445 = vadd.s32 %v1370, 4294967208
        %v1446 = vlaneseq
        %v1447 = vshrl.u32 %v1446, 7
        %v1448 = vsub.s32 %v1445, %v1447
        %v1449 = vrot.slane %v1008, %v1448
        %vm1450 = vcmask 786112
        %v1451 = vsel %vm1450, %v1449, %v1444
        %v1452 = vadd.s32 %v1370, 4294967200
        %v1453 = vlaneseq
        %v1454 = vshrl.u32 %v1453, 7
        %v1455 = vsub.s32 %v1452, %v1454
        %v1456 = vrot.slane %v1010, %v1455
        %vm1457 = vcmask 851712
        %v1458 = vsel %vm1457, %v1456, %v1451
        %v1459 = vadd.s32 %v1370, 4294967192
        %v1460 = vlaneseq
        %v1461 = vshrl.u32 %v1460, 7
        %v1462 = vsub.s32 %v1459, %v1461
        %v1463 = vrot.slane %v1012, %v1462
        %vm1464 = vcmask 917312
        %v1465 = vsel %vm1464, %v1463, %v1458
        %v1466 = vadd.s32 %v1370, 4294967184
        %v1467 = vlaneseq
        %v1468 = vshrl.u32 %v1467, 7
        %v1469 = vsub.s32 %v1466, %v1468
        %v1470 = vrot.slane %v1014, %v1469
        %vm1471 = vcmask 982912
        %v1472 = vsel %vm1471, %v1470, %v1465
        %v1473 = vadd.s32 %v1370, 4294967176
        %v1474 = vlaneseq
        %v1475 = vshrl.u32 %v1474, 7
        %v1476 = vsub.s32 %v1473, %v1475
        %v1477 = vrot.slane %v1016, %v1476
        %vm1478 = vcmask 1048512
        %v1479 = vsel %vm1478, %v1477, %v1472
        %v1480 = vlaneseq
        %v1481 = vshrl.u32 %v1480, 7
        %v1482 = vsub.s32 %v1370, %v1481
        %v1483 = vrot.slane %v1018, %v1482
        %v1484 = vlaneseq
        %v1485 = vshrl.u32 %v1484, 7
        %v1486 = vsub.s32 %v1375, %v1485
        %v1487 = vrot.slane %v1020, %v1486
        %v1488 = vsel %vm1380, %v1487, %v1483
        %v1489 = vlaneseq
        %v1490 = vshrl.u32 %v1489, 7
        %v1491 = vsub.s32 %v1382, %v1490
        %v1492 = vrot.slane %v1022, %v1491
        %v1493 = vsel %vm1387, %v1492, %v1488
        %v1494 = vlaneseq
        %v1495 = vshrl.u32 %v1494, 7
        %v1496 = vsub.s32 %v1389, %v1495
        %v1497 = vrot.slane %v1024, %v1496
        %v1498 = vsel %vm1394, %v1497, %v1493
        %v1499 = vlaneseq
        %v1500 = vshrl.u32 %v1499, 7
        %v1501 = vsub.s32 %v1396, %v1500
        %v1502 = vrot.slane %v1026, %v1501
        %v1503 = vsel %vm1401, %v1502, %v1498
        %v1504 = vlaneseq
        %v1505 = vshrl.u32 %v1504, 7
        %v1506 = vsub.s32 %v1403, %v1505
        %v1507 = vrot.slane %v1028, %v1506
        %v1508 = vsel %vm1408, %v1507, %v1503
        %v1509 = vlaneseq
        %v1510 = vshrl.u32 %v1509, 7
        %v1511 = vsub.s32 %v1410, %v1510
        %v1512 = vrot.slane %v1030, %v1511
        %v1513 = vsel %vm1415, %v1512, %v1508
        %v1514 = vlaneseq
        %v1515 = vshrl.u32 %v1514, 7
        %v1516 = vsub.s32 %v1417, %v1515
        %v1517 = vrot.slane %v1032, %v1516
        %v1518 = vsel %vm1422, %v1517, %v1513
        %v1519 = vlaneseq
        %v1520 = vshrl.u32 %v1519, 7
        %v1521 = vsub.s32 %v1424, %v1520
        %v1522 = vrot.slane %v1034, %v1521
        %v1523 = vsel %vm1429, %v1522, %v1518
        %v1524 = vlaneseq
        %v1525 = vshrl.u32 %v1524, 7
        %v1526 = vsub.s32 %v1431, %v1525
        %v1527 = vrot.slane %v1036, %v1526
        %v1528 = vsel %vm1436, %v1527, %v1523
        %v1529 = vlaneseq
        %v1530 = vshrl.u32 %v1529, 7
        %v1531 = vsub.s32 %v1438, %v1530
        %v1532 = vrot.slane %v1038, %v1531
        %v1533 = vsel %vm1443, %v1532, %v1528
        %v1534 = vlaneseq
        %v1535 = vshrl.u32 %v1534, 7
        %v1536 = vsub.s32 %v1445, %v1535
        %v1537 = vrot.slane %v1040, %v1536
        %v1538 = vsel %vm1450, %v1537, %v1533
        %v1539 = vlaneseq
        %v1540 = vshrl.u32 %v1539, 7
        %v1541 = vsub.s32 %v1452, %v1540
        %v1542 = vrot.slane %v1042, %v1541
        %v1543 = vsel %vm1457, %v1542, %v1538
        %v1544 = vlaneseq
        %v1545 = vshrl.u32 %v1544, 7
        %v1546 = vsub.s32 %v1459, %v1545
        %v1547 = vrot.slane %v1044, %v1546
        %v1548 = vsel %vm1464, %v1547, %v1543
        %v1549 = vlaneseq
        %v1550 = vshrl.u32 %v1549, 7
        %v1551 = vsub.s32 %v1466, %v1550
        %v1552 = vrot.slane %v1046, %v1551
        %v1553 = vsel %vm1471, %v1552, %v1548
        %v1554 = vlaneseq
        %v1555 = vshrl.u32 %v1554, 7
        %v1556 = vsub.s32 %v1473, %v1555
        %v1557 = vrot.slane %v1048, %v1556
        %v1558 = vsel %vm1478, %v1557, %v1553
        %v1559 = vlaneseq
        %v1560 = vshrl.u32 %v1559, 7
        %v1561 = vsub.s32 %v1370, %v1560
        %v1562 = vrot.slane %v1050, %v1561
        %v1563 = vlaneseq
        %v1564 = vshrl.u32 %v1563, 7
        %v1565 = vsub.s32 %v1375, %v1564
        %v1566 = vrot.slane %v1052, %v1565
        %v1567 = vsel %vm1380, %v1566, %v1562
        %v1568 = vlaneseq
        %v1569 = vshrl.u32 %v1568, 7
        %v1570 = vsub.s32 %v1382, %v1569
        %v1571 = vrot.slane %v1054, %v1570
        %v1572 = vsel %vm1387, %v1571, %v1567
        %v1573 = vlaneseq
        %v1574 = vshrl.u32 %v1573, 7
        %v1575 = vsub.s32 %v1389, %v1574
        %v1576 = vrot.slane %v1056, %v1575
        %v1577 = vsel %vm1394, %v1576, %v1572
        %v1578 = vlaneseq
        %v1579 = vshrl.u32 %v1578, 7
        %v1580 = vsub.s32 %v1396, %v1579
        %v1581 = vrot.slane %v1058, %v1580
        %v1582 = vsel %vm1401, %v1581, %v1577
        %v1583 = vlaneseq
        %v1584 = vshrl.u32 %v1583, 7
        %v1585 = vsub.s32 %v1403, %v1584
        %v1586 = vrot.slane %v1060, %v1585
        %v1587 = vsel %vm1408, %v1586, %v1582
        %v1588 = vlaneseq
        %v1589 = vshrl.u32 %v1588, 7
        %v1590 = vsub.s32 %v1410, %v1589
        %v1591 = vrot.slane %v1062, %v1590
        %v1592 = vsel %vm1415, %v1591, %v1587
        %v1593 = vlaneseq
        %v1594 = vshrl.u32 %v1593, 7
        %v1595 = vsub.s32 %v1417, %v1594
        %v1596 = vrot.slane %v1064, %v1595
        %v1597 = vsel %vm1422, %v1596, %v1592
        %v1598 = vlaneseq
        %v1599 = vshrl.u32 %v1598, 7
        %v1600 = vsub.s32 %v1424, %v1599
        %v1601 = vrot.slane %v1066, %v1600
        %v1602 = vsel %vm1429, %v1601, %v1597
        %v1603 = vlaneseq
        %v1604 = vshrl.u32 %v1603, 7
        %v1605 = vsub.s32 %v1431, %v1604
        %v1606 = vrot.slane %v1068, %v1605
        %v1607 = vsel %vm1436, %v1606, %v1602
        %v1608 = vlaneseq
        %v1609 = vshrl.u32 %v1608, 7
        %v1610 = vsub.s32 %v1438, %v1609
        %v1611 = vrot.slane %v1070, %v1610
        %v1612 = vsel %vm1443, %v1611, %v1607
        %v1613 = vlaneseq
        %v1614 = vshrl.u32 %v1613, 7
        %v1615 = vsub.s32 %v1445, %v1614
        %v1616 = vrot.slane %v1072, %v1615
        %v1617 = vsel %vm1450, %v1616, %v1612
        %v1618 = vlaneseq
        %v1619 = vshrl.u32 %v1618, 7
        %v1620 = vsub.s32 %v1452, %v1619
        %v1621 = vrot.slane %v1074, %v1620
        %v1622 = vsel %vm1457, %v1621, %v1617
        %v1623 = vlaneseq
        %v1624 = vshrl.u32 %v1623, 7
        %v1625 = vsub.s32 %v1459, %v1624
        %v1626 = vrot.slane %v1076, %v1625
        %v1627 = vsel %vm1464, %v1626, %v1622
        %v1628 = vlaneseq
        %v1629 = vshrl.u32 %v1628, 7
        %v1630 = vsub.s32 %v1466, %v1629
        %v1631 = vrot.slane %v1078, %v1630
        %v1632 = vsel %vm1471, %v1631, %v1627
        %v1633 = vlaneseq
        %v1634 = vshrl.u32 %v1633, 7
        %v1635 = vsub.s32 %v1473, %v1634
        %v1636 = vrot.slane %v1080, %v1635
        %v1637 = vsel %vm1478, %v1636, %v1632
        %v1638 = vlaneseq
        %v1639 = vshrl.u32 %v1638, 7
        %v1640 = vsub.s32 %v1370, %v1639
        %v1641 = vrot.slane %v1082, %v1640
        %v1642 = vlaneseq
        %v1643 = vshrl.u32 %v1642, 7
        %v1644 = vsub.s32 %v1375, %v1643
        %v1645 = vrot.slane %v1084, %v1644
        %v1646 = vsel %vm1380, %v1645, %v1641
        %v1647 = vlaneseq
        %v1648 = vshrl.u32 %v1647, 7
        %v1649 = vsub.s32 %v1382, %v1648
        %v1650 = vrot.slane %v1086, %v1649
        %v1651 = vsel %vm1387, %v1650, %v1646
        %v1652 = vlaneseq
        %v1653 = vshrl.u32 %v1652, 7
        %v1654 = vsub.s32 %v1389, %v1653
        %v1655 = vrot.slane %v1088, %v1654
        %v1656 = vsel %vm1394, %v1655, %v1651
        %v1657 = vlaneseq
        %v1658 = vshrl.u32 %v1657, 7
        %v1659 = vsub.s32 %v1396, %v1658
        %v1660 = vrot.slane %v1090, %v1659
        %v1661 = vsel %vm1401, %v1660, %v1656
        %v1662 = vlaneseq
        %v1663 = vshrl.u32 %v1662, 7
        %v1664 = vsub.s32 %v1403, %v1663
        %v1665 = vrot.slane %v1092, %v1664
        %v1666 = vsel %vm1408, %v1665, %v1661
        %v1667 = vlaneseq
        %v1668 = vshrl.u32 %v1667, 7
        %v1669 = vsub.s32 %v1410, %v1668
        %v1670 = vrot.slane %v1094, %v1669
        %v1671 = vsel %vm1415, %v1670, %v1666
        %v1672 = vlaneseq
        %v1673 = vshrl.u32 %v1672, 7
        %v1674 = vsub.s32 %v1417, %v1673
        %v1675 = vrot.slane %v1096, %v1674
        %v1676 = vsel %vm1422, %v1675, %v1671
        %v1677 = vlaneseq
        %v1678 = vshrl.u32 %v1677, 7
        %v1679 = vsub.s32 %v1424, %v1678
        %v1680 = vrot.slane %v1098, %v1679
        %v1681 = vsel %vm1429, %v1680, %v1676
        %v1682 = vlaneseq
        %v1683 = vshrl.u32 %v1682, 7
        %v1684 = vsub.s32 %v1431, %v1683
        %v1685 = vrot.slane %v1100, %v1684
        %v1686 = vsel %vm1436, %v1685, %v1681
        %v1687 = vlaneseq
        %v1688 = vshrl.u32 %v1687, 7
        %v1689 = vsub.s32 %v1438, %v1688
        %v1690 = vrot.slane %v1102, %v1689
        %v1691 = vsel %vm1443, %v1690, %v1686
        %v1692 = vlaneseq
        %v1693 = vshrl.u32 %v1692, 7
        %v1694 = vsub.s32 %v1445, %v1693
        %v1695 = vrot.slane %v1104, %v1694
        %v1696 = vsel %vm1450, %v1695, %v1691
        %v1697 = vlaneseq
        %v1698 = vshrl.u32 %v1697, 7
        %v1699 = vsub.s32 %v1452, %v1698
        %v1700 = vrot.slane %v1106, %v1699
        %v1701 = vsel %vm1457, %v1700, %v1696
        %v1702 = vlaneseq
        %v1703 = vshrl.u32 %v1702, 7
        %v1704 = vsub.s32 %v1459, %v1703
        %v1705 = vrot.slane %v1108, %v1704
        %v1706 = vsel %vm1464, %v1705, %v1701
        %v1707 = vlaneseq
        %v1708 = vshrl.u32 %v1707, 7
        %v1709 = vsub.s32 %v1466, %v1708
        %v1710 = vrot.slane %v1110, %v1709
        %v1711 = vsel %vm1471, %v1710, %v1706
        %v1712 = vlaneseq
        %v1713 = vshrl.u32 %v1712, 7
        %v1714 = vsub.s32 %v1473, %v1713
        %v1715 = vrot.slane %v1112, %v1714
        %v1716 = vsel %vm1478, %v1715, %v1711
        %v1717 = vlaneseq
        %v1718 = vshrl.u32 %v1717, 7
        %v1719 = vsub.s32 %v1370, %v1718
        %v1720 = vrot.slane %v1114, %v1719
        %v1721 = vlaneseq
        %v1722 = vshrl.u32 %v1721, 7
        %v1723 = vsub.s32 %v1375, %v1722
        %v1724 = vrot.slane %v1116, %v1723
        %v1725 = vsel %vm1380, %v1724, %v1720
        %v1726 = vlaneseq
        %v1727 = vshrl.u32 %v1726, 7
        %v1728 = vsub.s32 %v1382, %v1727
        %v1729 = vrot.slane %v1118, %v1728
        %v1730 = vsel %vm1387, %v1729, %v1725
        %v1731 = vlaneseq
        %v1732 = vshrl.u32 %v1731, 7
        %v1733 = vsub.s32 %v1389, %v1732
        %v1734 = vrot.slane %v1120, %v1733
        %v1735 = vsel %vm1394, %v1734, %v1730
        %v1736 = vlaneseq
        %v1737 = vshrl.u32 %v1736, 7
        %v1738 = vsub.s32 %v1396, %v1737
        %v1739 = vrot.slane %v1122, %v1738
        %v1740 = vsel %vm1401, %v1739, %v1735
        %v1741 = vlaneseq
        %v1742 = vshrl.u32 %v1741, 7
        %v1743 = vsub.s32 %v1403, %v1742
        %v1744 = vrot.slane %v1124, %v1743
        %v1745 = vsel %vm1408, %v1744, %v1740
        %v1746 = vlaneseq
        %v1747 = vshrl.u32 %v1746, 7
        %v1748 = vsub.s32 %v1410, %v1747
        %v1749 = vrot.slane %v1126, %v1748
        %v1750 = vsel %vm1415, %v1749, %v1745
        %v1751 = vlaneseq
        %v1752 = vshrl.u32 %v1751, 7
        %v1753 = vsub.s32 %v1417, %v1752
        %v1754 = vrot.slane %v1128, %v1753
        %v1755 = vsel %vm1422, %v1754, %v1750
        %v1756 = vlaneseq
        %v1757 = vshrl.u32 %v1756, 7
        %v1758 = vsub.s32 %v1424, %v1757
        %v1759 = vrot.slane %v1130, %v1758
        %v1760 = vsel %vm1429, %v1759, %v1755
        %v1761 = vlaneseq
        %v1762 = vshrl.u32 %v1761, 7
        %v1763 = vsub.s32 %v1431, %v1762
        %v1764 = vrot.slane %v1132, %v1763
        %v1765 = vsel %vm1436, %v1764, %v1760
        %v1766 = vlaneseq
        %v1767 = vshrl.u32 %v1766, 7
        %v1768 = vsub.s32 %v1438, %v1767
        %v1769 = vrot.slane %v1134, %v1768
        %v1770 = vsel %vm1443, %v1769, %v1765
        %v1771 = vlaneseq
        %v1772 = vshrl.u32 %v1771, 7
        %v1773 = vsub.s32 %v1445, %v1772
        %v1774 = vrot.slane %v1136, %v1773
        %v1775 = vsel %vm1450, %v1774, %v1770
        %v1776 = vlaneseq
        %v1777 = vshrl.u32 %v1776, 7
        %v1778 = vsub.s32 %v1452, %v1777
        %v1779 = vrot.slane %v1138, %v1778
        %v1780 = vsel %vm1457, %v1779, %v1775
        %v1781 = vlaneseq
        %v1782 = vshrl.u32 %v1781, 7
        %v1783 = vsub.s32 %v1459, %v1782
        %v1784 = vrot.slane %v1140, %v1783
        %v1785 = vsel %vm1464, %v1784, %v1780
        %v1786 = vlaneseq
        %v1787 = vshrl.u32 %v1786, 7
        %v1788 = vsub.s32 %v1466, %v1787
        %v1789 = vrot.slane %v1142, %v1788
        %v1790 = vsel %vm1471, %v1789, %v1785
        %v1791 = vlaneseq
        %v1792 = vshrl.u32 %v1791, 7
        %v1793 = vsub.s32 %v1473, %v1792
        %v1794 = vrot.slane %v1144, %v1793
        %v1795 = vsel %vm1478, %v1794, %v1790
        %v1796 = vlaneseq
        %v1797 = vshrl.u32 %v1796, 7
        %v1798 = vsub.s32 %v1370, %v1797
        %v1799 = vrot.slane %v1146, %v1798
        %v1800 = vlaneseq
        %v1801 = vshrl.u32 %v1800, 7
        %v1802 = vsub.s32 %v1375, %v1801
        %v1803 = vrot.slane %v1148, %v1802
        %v1804 = vsel %vm1380, %v1803, %v1799
        %v1805 = vlaneseq
        %v1806 = vshrl.u32 %v1805, 7
        %v1807 = vsub.s32 %v1382, %v1806
        %v1808 = vrot.slane %v1150, %v1807
        %v1809 = vsel %vm1387, %v1808, %v1804
        %v1810 = vlaneseq
        %v1811 = vshrl.u32 %v1810, 7
        %v1812 = vsub.s32 %v1389, %v1811
        %v1813 = vrot.slane %v1152, %v1812
        %v1814 = vsel %vm1394, %v1813, %v1809
        %v1815 = vlaneseq
        %v1816 = vshrl.u32 %v1815, 7
        %v1817 = vsub.s32 %v1396, %v1816
        %v1818 = vrot.slane %v1154, %v1817
        %v1819 = vsel %vm1401, %v1818, %v1814
        %v1820 = vlaneseq
        %v1821 = vshrl.u32 %v1820, 7
        %v1822 = vsub.s32 %v1403, %v1821
        %v1823 = vrot.slane %v1156, %v1822
        %v1824 = vsel %vm1408, %v1823, %v1819
        %v1825 = vlaneseq
        %v1826 = vshrl.u32 %v1825, 7
        %v1827 = vsub.s32 %v1410, %v1826
        %v1828 = vrot.slane %v1158, %v1827
        %v1829 = vsel %vm1415, %v1828, %v1824
        %v1830 = vlaneseq
        %v1831 = vshrl.u32 %v1830, 7
        %v1832 = vsub.s32 %v1417, %v1831
        %v1833 = vrot.slane %v1160, %v1832
        %v1834 = vsel %vm1422, %v1833, %v1829
        %v1835 = vlaneseq
        %v1836 = vshrl.u32 %v1835, 7
        %v1837 = vsub.s32 %v1424, %v1836
        %v1838 = vrot.slane %v1162, %v1837
        %v1839 = vsel %vm1429, %v1838, %v1834
        %v1840 = vlaneseq
        %v1841 = vshrl.u32 %v1840, 7
        %v1842 = vsub.s32 %v1431, %v1841
        %v1843 = vrot.slane %v1164, %v1842
        %v1844 = vsel %vm1436, %v1843, %v1839
        %v1845 = vlaneseq
        %v1846 = vshrl.u32 %v1845, 7
        %v1847 = vsub.s32 %v1438, %v1846
        %v1848 = vrot.slane %v1166, %v1847
        %v1849 = vsel %vm1443, %v1848, %v1844
        %v1850 = vlaneseq
        %v1851 = vshrl.u32 %v1850, 7
        %v1852 = vsub.s32 %v1445, %v1851
        %v1853 = vrot.slane %v1168, %v1852
        %v1854 = vsel %vm1450, %v1853, %v1849
        %v1855 = vlaneseq
        %v1856 = vshrl.u32 %v1855, 7
        %v1857 = vsub.s32 %v1452, %v1856
        %v1858 = vrot.slane %v1170, %v1857
        %v1859 = vsel %vm1457, %v1858, %v1854
        %v1860 = vlaneseq
        %v1861 = vshrl.u32 %v1860, 7
        %v1862 = vsub.s32 %v1459, %v1861
        %v1863 = vrot.slane %v1172, %v1862
        %v1864 = vsel %vm1464, %v1863, %v1859
        %v1865 = vlaneseq
        %v1866 = vshrl.u32 %v1865, 7
        %v1867 = vsub.s32 %v1466, %v1866
        %v1868 = vrot.slane %v1174, %v1867
        %v1869 = vsel %vm1471, %v1868, %v1864
        %v1870 = vlaneseq
        %v1871 = vshrl.u32 %v1870, 7
        %v1872 = vsub.s32 %v1473, %v1871
        %v1873 = vrot.slane %v1176, %v1872
        %v1874 = vsel %vm1478, %v1873, %v1869
        %v1875 = vlaneseq
        %v1876 = vshrl.u32 %v1875, 7
        %v1877 = vsub.s32 %v1370, %v1876
        %v1878 = vrot.slane %v1178, %v1877
        %v1879 = vlaneseq
        %v1880 = vshrl.u32 %v1879, 7
        %v1881 = vsub.s32 %v1375, %v1880
        %v1882 = vrot.slane %v1180, %v1881
        %v1883 = vsel %vm1380, %v1882, %v1878
        %v1884 = vlaneseq
        %v1885 = vshrl.u32 %v1884, 7
        %v1886 = vsub.s32 %v1382, %v1885
        %v1887 = vrot.slane %v1182, %v1886
        %v1888 = vsel %vm1387, %v1887, %v1883
        %v1889 = vlaneseq
        %v1890 = vshrl.u32 %v1889, 7
        %v1891 = vsub.s32 %v1389, %v1890
        %v1892 = vrot.slane %v1184, %v1891
        %v1893 = vsel %vm1394, %v1892, %v1888
        %v1894 = vlaneseq
        %v1895 = vshrl.u32 %v1894, 7
        %v1896 = vsub.s32 %v1396, %v1895
        %v1897 = vrot.slane %v1186, %v1896
        %v1898 = vsel %vm1401, %v1897, %v1893
        %v1899 = vlaneseq
        %v1900 = vshrl.u32 %v1899, 7
        %v1901 = vsub.s32 %v1403, %v1900
        %v1902 = vrot.slane %v1188, %v1901
        %v1903 = vsel %vm1408, %v1902, %v1898
        %v1904 = vlaneseq
        %v1905 = vshrl.u32 %v1904, 7
        %v1906 = vsub.s32 %v1410, %v1905
        %v1907 = vrot.slane %v1190, %v1906
        %v1908 = vsel %vm1415, %v1907, %v1903
        %v1909 = vlaneseq
        %v1910 = vshrl.u32 %v1909, 7
        %v1911 = vsub.s32 %v1417, %v1910
        %v1912 = vrot.slane %v1192, %v1911
        %v1913 = vsel %vm1422, %v1912, %v1908
        %v1914 = vlaneseq
        %v1915 = vshrl.u32 %v1914, 7
        %v1916 = vsub.s32 %v1424, %v1915
        %v1917 = vrot.slane %v1194, %v1916
        %v1918 = vsel %vm1429, %v1917, %v1913
        %v1919 = vlaneseq
        %v1920 = vshrl.u32 %v1919, 7
        %v1921 = vsub.s32 %v1431, %v1920
        %v1922 = vrot.slane %v1196, %v1921
        %v1923 = vsel %vm1436, %v1922, %v1918
        %v1924 = vlaneseq
        %v1925 = vshrl.u32 %v1924, 7
        %v1926 = vsub.s32 %v1438, %v1925
        %v1927 = vrot.slane %v1198, %v1926
        %v1928 = vsel %vm1443, %v1927, %v1923
        %v1929 = vlaneseq
        %v1930 = vshrl.u32 %v1929, 7
        %v1931 = vsub.s32 %v1445, %v1930
        %v1932 = vrot.slane %v1200, %v1931
        %v1933 = vsel %vm1450, %v1932, %v1928
        %v1934 = vlaneseq
        %v1935 = vshrl.u32 %v1934, 7
        %v1936 = vsub.s32 %v1452, %v1935
        %v1937 = vrot.slane %v1202, %v1936
        %v1938 = vsel %vm1457, %v1937, %v1933
        %v1939 = vlaneseq
        %v1940 = vshrl.u32 %v1939, 7
        %v1941 = vsub.s32 %v1459, %v1940
        %v1942 = vrot.slane %v1204, %v1941
        %v1943 = vsel %vm1464, %v1942, %v1938
        %v1944 = vlaneseq
        %v1945 = vshrl.u32 %v1944, 7
        %v1946 = vsub.s32 %v1466, %v1945
        %v1947 = vrot.slane %v1206, %v1946
        %v1948 = vsel %vm1471, %v1947, %v1943
        %v1949 = vlaneseq
        %v1950 = vshrl.u32 %v1949, 7
        %v1951 = vsub.s32 %v1473, %v1950
        %v1952 = vrot.slane %v1208, %v1951
        %v1953 = vsel %vm1478, %v1952, %v1948
        %v1954 = vlaneseq
        %v1955 = vshrl.u32 %v1954, 7
        %v1956 = vsub.s32 %v1370, %v1955
        %v1957 = vrot.slane %v1210, %v1956
        %v1958 = vlaneseq
        %v1959 = vshrl.u32 %v1958, 7
        %v1960 = vsub.s32 %v1375, %v1959
        %v1961 = vrot.slane %v1212, %v1960
        %v1962 = vsel %vm1380, %v1961, %v1957
        %v1963 = vlaneseq
        %v1964 = vshrl.u32 %v1963, 7
        %v1965 = vsub.s32 %v1382, %v1964
        %v1966 = vrot.slane %v1214, %v1965
        %v1967 = vsel %vm1387, %v1966, %v1962
        %v1968 = vlaneseq
        %v1969 = vshrl.u32 %v1968, 7
        %v1970 = vsub.s32 %v1389, %v1969
        %v1971 = vrot.slane %v1216, %v1970
        %v1972 = vsel %vm1394, %v1971, %v1967
        %v1973 = vlaneseq
        %v1974 = vshrl.u32 %v1973, 7
        %v1975 = vsub.s32 %v1396, %v1974
        %v1976 = vrot.slane %v1218, %v1975
        %v1977 = vsel %vm1401, %v1976, %v1972
        %v1978 = vlaneseq
        %v1979 = vshrl.u32 %v1978, 7
        %v1980 = vsub.s32 %v1403, %v1979
        %v1981 = vrot.slane %v1220, %v1980
        %v1982 = vsel %vm1408, %v1981, %v1977
        %v1983 = vlaneseq
        %v1984 = vshrl.u32 %v1983, 7
        %v1985 = vsub.s32 %v1410, %v1984
        %v1986 = vrot.slane %v1222, %v1985
        %v1987 = vsel %vm1415, %v1986, %v1982
        %v1988 = vlaneseq
        %v1989 = vshrl.u32 %v1988, 7
        %v1990 = vsub.s32 %v1417, %v1989
        %v1991 = vrot.slane %v1224, %v1990
        %v1992 = vsel %vm1422, %v1991, %v1987
        %v1993 = vlaneseq
        %v1994 = vshrl.u32 %v1993, 7
        %v1995 = vsub.s32 %v1424, %v1994
        %v1996 = vrot.slane %v1226, %v1995
        %v1997 = vsel %vm1429, %v1996, %v1992
        %v1998 = vlaneseq
        %v1999 = vshrl.u32 %v1998, 7
        %v2000 = vsub.s32 %v1431, %v1999
        %v2001 = vrot.slane %v1228, %v2000
        %v2002 = vsel %vm1436, %v2001, %v1997
        %v2003 = vlaneseq
        %v2004 = vshrl.u32 %v2003, 7
        %v2005 = vsub.s32 %v1438, %v2004
        %v2006 = vrot.slane %v1230, %v2005
        %v2007 = vsel %vm1443, %v2006, %v2002
        %v2008 = vlaneseq
        %v2009 = vshrl.u32 %v2008, 7
        %v2010 = vsub.s32 %v1445, %v2009
        %v2011 = vrot.slane %v1232, %v2010
        %v2012 = vsel %vm1450, %v2011, %v2007
        %v2013 = vlaneseq
        %v2014 = vshrl.u32 %v2013, 7
        %v2015 = vsub.s32 %v1452, %v2014
        %v2016 = vrot.slane %v1234, %v2015
        %v2017 = vsel %vm1457, %v2016, %v2012
        %v2018 = vlaneseq
        %v2019 = vshrl.u32 %v2018, 7
        %v2020 = vsub.s32 %v1459, %v2019
        %v2021 = vrot.slane %v1236, %v2020
        %v2022 = vsel %vm1464, %v2021, %v2017
        %v2023 = vlaneseq
        %v2024 = vshrl.u32 %v2023, 7
        %v2025 = vsub.s32 %v1466, %v2024
        %v2026 = vrot.slane %v1238, %v2025
        %v2027 = vsel %vm1471, %v2026, %v2022
        %v2028 = vlaneseq
        %v2029 = vshrl.u32 %v2028, 7
        %v2030 = vsub.s32 %v1473, %v2029
        %v2031 = vrot.slane %v1240, %v2030
        %v2032 = vsel %vm1478, %v2031, %v2027
        %vm2033 = vcmask 1041409
        %v2034 = vsel %vm2033, %v1558, %v1479
        %vm2035 = vcmask 1042434
        %v2036 = vsel %vm2035, %v1637, %v2034
        %vm2037 = vcmask 1043459
        %v2038 = vsel %vm2037, %v1716, %v2036
        %vm2039 = vcmask 1044484
        %v2040 = vsel %vm2039, %v1795, %v2038
        %vm2041 = vcmask 1045509
        %v2042 = vsel %vm2041, %v1874, %v2040
        %vm2043 = vcmask 1046534
        %v2044 = vsel %vm2043, %v1953, %v2042
        %vm2045 = vcmask 1047559
        %v2046 = vsel %vm2045, %v2032, %v2044
        %2048 = vst [vmem:[#allocation5] sm:$0xff] %v2046
        %v2049 = vld [vmem:[#allocation5] sm:$0xff]
        %v2050 = vld [vmem:[%s410] sm:$0xff]
        %v2051 = vadd.f32 %v2049, %v2050
        %v2052 = vld [vmem:[#allocation2] sm:$0xff]
        %2053 = vmax.xlane.f32.xlu0 %v2051
        %v2054 = vpop.xlane.xlu0 %2053
        %v2055 = vmax.f32 %v2052, %v2054
        %v2056 = vsub.f32 %v2052, %v2055
        %v2057 = vmul.f32 %v2056, 1.442695
        %v2058 = vpow.pop %v2057
        %2060 = vset.pattern.permute.xlu0 0
        %2061 = vperm.xlu0 %2060, %v2055
        %v2062 = vpop.permute.xlu0 %2061
        %v2064 = vsub.f32 %v2051, %v2062
        %v2065 = vmul.f32 %v2064, 1.442695
        %v2066 = vpow.pop %v2065
        %v2067 = vld [vmem:[#allocation3] sm:$0xff]
        %v2068 = vmul.f32 %v2058, %v2067
        %2069 = vadd.xlane.f32.xlu0 %v2066
        %v2070 = vpop.xlane.xlu0 %2069
        %v2071 = vadd.f32 %v2068, %v2070
        %vm2072 = vcmask 7168
        %2073 = vst.msk [vmem:[#allocation3] sm:$0xff] %vm2072, %v2071
        %v2074 = vld [vmem:[#allocation4] sm:$0xff]
        %2076 = vset.pattern.permute.xlu0 0
        %2077 = vperm.xlu0 %2076, %v2058
        %v2078 = vpop.permute.xlu0 %2077
        %v2080 = vmul.f32 %v2078, %v2074
        %v2081 = vpack.c.bf16 %v2066, %v2066
        %v2082 = vpack.c.bf16 %v489, %v488
        %v2083 = vpack.c.bf16 %v491, %v490
        %v2084 = vpack.c.bf16 %v493, %v492
        %v2085 = vpack.c.bf16 %v495, %v494
        %v2086 = vpack.c.bf16 %v497, %v496
        %v2087 = vpack.c.bf16 %v499, %v498
        %v2088 = vpack.c.bf16 %v501, %v500
        %v2089 = vpack.c.bf16 %v503, %v502
        %2090 = vmatprep.subr.bf16.mxu0 0
        %2091 = vmatpush1.bf16.msra.mxu0 %v2082
        %2092 = vmatprep.subr.bf16.mxu0 0
        %2093 = vmatpush1.bf16.msra.mxu0 %v2083
        %2094 = vmatprep.subr.bf16.mxu0 0
        %2095 = vmatpush1.bf16.msra.mxu0 %v2084
        %2096 = vmatprep.subr.bf16.mxu0 0
        %2097 = vmatpush1.bf16.msra.mxu0 %v2085
        %2098 = vmatprep.subr.bf16.mxu0 0
        %2099 = vmatpush1.bf16.msra.mxu0 %v2086
        %2100 = vmatprep.subr.bf16.mxu0 0
        %2101 = vmatpush1.bf16.msra.mxu0 %v2087
        %2102 = vmatprep.subr.bf16.mxu0 0
        %2103 = vmatpush1.bf16.msra.mxu0 %v2088
        %2104 = vmatprep.subr.bf16.mxu0 0
        %2105 = vmatpush1.bf16.msra.mxu0 %v2089
        %2106 = vmatprep.subr.bf16.mxu0 0
        %2107 = vmatpush1.bf16.msra.mxu0 0
        %2108 = vmatprep.subr.bf16.mxu0 0
        %2109 = vmatpush1.bf16.msra.mxu0 0
        %2110 = vmatprep.subr.bf16.mxu0 0
        %2111 = vmatpush1.bf16.msra.mxu0 0
        %2112 = vmatprep.subr.bf16.mxu0 0
        %2113 = vmatpush1.bf16.msra.mxu0 0
        %2114 = vmatprep.subr.bf16.mxu0 0
        %2115 = vmatpush1.bf16.msra.mxu0 0
        %2116 = vmatprep.subr.bf16.mxu0 0
        %2117 = vmatpush1.bf16.msra.mxu0 0
        %2118 = vmatprep.subr.bf16.mxu0 0
        %2119 = vmatpush1.bf16.msra.mxu0 0
        %2120 = vmatprep.subr.bf16.mxu0 0
        %2121 = vmatpush1.bf16.msra.mxu0 0
        %2122 = vmatprep.mubr.bf16.mxu0 0
        %2123 = vmatmul.mubr.bf16.gmra.mrb[0].mxu0 %v2081
        %v2124 = vpop.f32.mrb[0].mxu0
        %v2125 = vadd.f32 0.0, %v2124
        %v2126 = vpop.f32.mrb[0].mxu0
        %v2127 = vpop.f32.mrb[0].mxu0
        %v2128 = vpop.f32.mrb[0].mxu0
        %2129 = vdwg.mxu0
        %v2130 = vadd.f32 %v2080, %v2125
        %2131 = vst [vmem:[#allocation4] sm:$0xff] %v2130
        %2132 = vst.msk [vmem:[#allocation2] sm:$0xff] %vm2072, %v2055
        // Predicated region
        $region73: #{tpu_custom_call.1} parent=47 // pred_check
          %p2133 = pneg %p463
        $region74: #{tpu_custom_call.1} parent=47 // pred_check_branch
          %2135 = sbr.rel (%p2133) target = $region76
        $region75: #{tpu_custom_call.1} parent=47 // pred_region
          %v2136 = vld [vmem:[#allocation4] sm:$0xff]
          %v2137 = vld [vmem:[#allocation3] sm:$0xff]
          %v2138 = vrcp.pop %v2137
          %2140 = vset.pattern.permute.xlu0 0
          %2141 = vperm.xlu0 %2140, %v2138
          %v2142 = vpop.permute.xlu0 %2141
          %v2144 = vmul.f32 %v2136, %v2142
          %v2145 = vld [vmem:[#allocation14] sm:$0xff]
          %v2146 = vld [vmem:[#allocation14 + $0x8] sm:$0xff]
          %v2147 = vld [vmem:[#allocation14 + $0x10] sm:$0xff]
          %v2148 = vld [vmem:[#allocation14 + $0x18] sm:$0xff]
          %v2149 = vld [vmem:[#allocation14 + $0x20] sm:$0xff]
          %v2150 = vld [vmem:[#allocation14 + $0x28] sm:$0xff]
          %v2151 = vld [vmem:[#allocation14 + $0x30] sm:$0xff]
          %v2152 = vld [vmem:[#allocation14 + $0x38] sm:$0xff]
          %v2153 = vld [vmem:[#allocation14 + $0x40] sm:$0xff]
          %v2154 = vld [vmem:[#allocation14 + $0x48] sm:$0xff]
          %v2155 = vld [vmem:[#allocation14 + $0x50] sm:$0xff]
          %v2156 = vld [vmem:[#allocation14 + $0x58] sm:$0xff]
          %v2157 = vld [vmem:[#allocation14 + $0x60] sm:$0xff]
          %v2158 = vld [vmem:[#allocation14 + $0x68] sm:$0xff]
          %v2159 = vld [vmem:[#allocation14 + $0x70] sm:$0xff]
          %v2160 = vld [vmem:[#allocation14 + $0x78] sm:$0xff]
          %v2161 = vld [vmem:[%s6] sm:$0x1]
          %v2163 = vlaneseq
          %v2164 = vshrl.u32 %v2163, 7
          %v2165 = vsub.s32 0, %v2164
          %v2166 = vrot.slane %v2161, %v2165
          %2168 = vmatprep.subr.mxu0 0.0
          %2169 = vmatpush1.msra.mxu0 %v2145
          %2170 = vmatprep.subr.mxu0 0.0
          %2171 = vmatpush1.msra.mxu0 %v2146
          %2172 = vmatprep.subr.mxu0 0.0
          %2173 = vmatpush1.msra.mxu0 %v2147
          %2174 = vmatprep.subr.mxu0 0.0
          %2175 = vmatpush1.msra.mxu0 %v2148
          %2176 = vmatprep.subr.mxu0 0.0
          %2177 = vmatpush1.msra.mxu0 %v2149
          %2178 = vmatprep.subr.mxu0 0.0
          %2179 = vmatpush1.msra.mxu0 %v2150
          %2180 = vmatprep.subr.mxu0 0.0
          %2181 = vmatpush1.msra.mxu0 %v2151
          %2182 = vmatprep.subr.mxu0 0.0
          %2183 = vmatpush1.msra.mxu0 %v2152
          %2184 = vmatprep.subr.mxu0 0.0
          %2185 = vmatpush1.msra.mxu0 %v2153
          %2186 = vmatprep.subr.mxu0 0.0
          %2187 = vmatpush1.msra.mxu0 %v2154
          %2188 = vmatprep.subr.mxu0 0.0
          %2189 = vmatpush1.msra.mxu0 %v2155
          %2190 = vmatprep.subr.mxu0 0.0
          %2191 = vmatpush1.msra.mxu0 %v2156
          %2192 = vmatprep.subr.mxu0 0.0
          %2193 = vmatpush1.msra.mxu0 %v2157
          %2194 = vmatprep.subr.mxu0 0.0
          %2195 = vmatpush1.msra.mxu0 %v2158
          %2196 = vmatprep.subr.mxu0 0.0
          %2197 = vmatpush1.msra.mxu0 %v2159
          %2198 = vmatprep.subr.mxu0 0.0
          %2199 = vmatpush1.msra.mxu0 %v2160
          %2200 = vmatprep.subr.mxu0 0.0
          %2201 = vmatpush1.msra.mxu0 0.0
          %2202 = vmatprep.subr.mxu0 0.0
          %2203 = vmatpush1.msra.mxu0 0.0
          %2204 = vmatprep.subr.mxu0 0.0
          %2205 = vmatpush1.msra.mxu0 0.0
          %2206 = vmatprep.subr.mxu0 0.0
          %2207 = vmatpush1.msra.mxu0 0.0
          %2208 = vmatprep.subr.mxu0 0.0
          %2209 = vmatpush1.msra.mxu0 0.0
          %2210 = vmatprep.subr.mxu0 0.0
          %2211 = vmatpush1.msra.mxu0 0.0
          %2212 = vmatprep.subr.mxu0 0.0
          %2213 = vmatpush1.msra.mxu0 0.0
          %2214 = vmatprep.subr.mxu0 0.0
          %2215 = vmatpush1.msra.mxu0 0.0
          %2216 = vmatprep.subr.mxu0 0.0
          %2217 = vmatpush1.msra.mxu0 0.0
          %2218 = vmatprep.subr.mxu0 0.0
          %2219 = vmatpush1.msra.mxu0 0.0
          %2220 = vmatprep.subr.mxu0 0.0
          %2221 = vmatpush1.msra.mxu0 0.0
          %2222 = vmatprep.subr.mxu0 0.0
          %2223 = vmatpush1.msra.mxu0 0.0
          %2224 = vmatprep.subr.mxu0 0.0
          %2225 = vmatpush1.msra.mxu0 0.0
          %2226 = vmatprep.subr.mxu0 0.0
          %2227 = vmatpush1.msra.mxu0 0.0
          %2228 = vmatprep.subr.mxu0 0.0
          %2229 = vmatpush1.msra.mxu0 0.0
          %2230 = vmatprep.subr.mxu0 0.0
          %2231 = vmatpush1.msra.mxu0 0.0
          %2232 = vmatprep.mubr.f32.mxu0 0.0
          %2233 = vmatmul.mubr.f32.gmra.mrb[0].mxu0 %v2144
          %v2234 = vpop.f32.mrb[0].mxu0
          %v2235 = vadd.f32 %v2166, %v2234
          %v2236 = vpop.f32.mrb[0].mxu0
          %2237 = vdwg.mxu0
          %v2238 = vadd.f32 %v2235, %v471
          %2239 = vst [vmem:[%s459] sm:$0xff] %v2238
        $region76: #{tpu_custom_call.1} parent=47 // pred_fallthru
          _
        %s2240 = sand.u32 %s236, 1
        %s2241 = scalar_lea.sflag [#allocation8], %s2240
        %s2242 = sand.u32 %s236, 1
        %s2243 = smul.addr %s2242, 8
        %s2244 = scalar_lea.vmem [#allocation15], %s2243
        // Predicated region
        $region77: #{tpu_custom_call.1} parent=47 // pred_check
          %p2245 = pneg %p246
        $region78: #{tpu_custom_call.1} parent=47 // pred_check_branch
          %2247 = sbr.rel (%p2245) target = $region80
        $region79: #{tpu_custom_call.1} parent=47 // pred_region
          %s2249 = ssub.s32 128, 128
          %2250 = vsyncadd %s2241, %s2249
          %s2251 = sadd.s32 %s36, %s35
          %s2252 = smul.addr %s2251, 128
          %s2253 = scalar_lea.hbm %s7, %s2252
          %s2255 = sshll.u32 %s2244, 4
          %s2256 = int_to_ptr.vmem [resolvable:$true] %s2255
          %2258 = dma.vmem_to_hbm [thread:$0]  %s2256, 128, %s2253, %s2241
        $region80: #{tpu_custom_call.1} parent=47 // pred_fallthru
          _
      $region48: #{tpu_custom_call.1} parent=5 // pred_fallthru
        _
      %p2259 = scmp.le.s32.totalorder 2, %s25
      // Predicated region
      $region81: #{tpu_custom_call.1} parent=5 // pred_check
        %p2260 = pneg %p2259
      $region82: #{tpu_custom_call.1} parent=5 // pred_check_branch
        %2262 = sbr.rel (%p2260) target = $region84
      $region83: #{tpu_custom_call.1} parent=5 // pred_region
        %s2263 = ssub.s32 %s25, 2
        // Predicated region
        $region85: #{tpu_custom_call.1} parent=83 // pred_check
          %p2264 = pneg %p252
        $region86: #{tpu_custom_call.1} parent=83 // pred_check_branch
          %2266 = sbr.rel (%p2264) target = $region88
        $region87: #{tpu_custom_call.1} parent=83 // pred_region
          %s2267 = sand.u32 %s237, 1
          %s2268 = scalar_lea.sflag [#allocation8], %s2267
          %s2269 = sand.u32 %s237, 1
          %s2270 = smul.addr %s2269, 8
          %s2271 = scalar_lea.vmem [#allocation15], %s2270
          %2272 = dma.done %s2268, 128
        $region88: #{tpu_custom_call.1} parent=83 // pred_fallthru
          _
      $region84: #{tpu_custom_call.1} parent=5 // pred_fallthru
        _
    $region6: #{tpu_custom_call.1} parent=1 // loop_footer
      %s29 = sadd.s32 1, %s25
    $region7: #{tpu_custom_call.1} parent=1 // loop_footer_branch
      %24 = sbr.rel target = $region3
    $region8: #{tpu_custom_call.1} parent=1 // loop_exit
      _
    %2273 = vsyncpa [#allocation7], 1
    %s2274 = scalar_lea.sflag [#allocation7], 1
    %2275 = vsyncpa %s2274, 1
    %2276 = vsyncpa [#allocation10], 1
    %s2277 = scalar_lea.sflag [#allocation10], 1
    %2278 = vsyncpa %s2277, 1
    %2279 = vsyncpa [#allocation13], 1
    %s2280 = scalar_lea.sflag [#allocation13], 1
    %2281 = vsyncpa %s2280, 1
    %2282 = vsyncpa [#allocation8], 1
    %s2283 = scalar_lea.sflag [#allocation8], 1
    %2284 = vsyncpa %s2283, 1

</llo_original>
